<compile_context>
chip_gen: v7x
topology: tpu7x:2x2x1
jax: 0.10.0
libtpu: 0.0.40
codegen_flags: <defaults>
</compile_context>

<pallas_src>
import functools

import jax
import jax.numpy as jnp
from jax import lax
from jax.experimental import pallas as pl
from jax.experimental.pallas import tpu as pltpu


# -----------------------------------------------------------------------------
# activation (static choice, matches activation_func in the PyTorch module)
# -----------------------------------------------------------------------------
def _act(x, activation):
    if activation == "relu":
        return jnp.maximum(x, 0.0)
    if activation == "leaky_relu":
        # TODO(synk): negative_slope hard-coded to the module default 0.01.
        return jnp.where(x >= 0.0, x, 0.01 * x)
    if activation == "selu":
        alpha = 1.6732632423543772
        scale = 1.0507009873554805
        return scale * jnp.where(x > 0.0, x, alpha * (jnp.exp(x) - 1.0))
    return x  # 'none'


# -----------------------------------------------------------------------------
# fused Pallas kernel: one grid step processes a (TB, L, Cp) batch tile
# -----------------------------------------------------------------------------
def _residual_block_kernel(x_ref, vec_ref, w1_ref, w2_ref, o_ref, hpad_ref,
                           *, K, dilation, pad, activation):
    # x_ref   : (TB, L, Cp)   token-major activations (channel dim lane-dense)
    # vec_ref : (4, Cp)       [bn1_scale, bn1_shift, b1_folded(bn2), b2]
    # w*_ref  : (K*Cp, Cp)    im2col right-matmul weights (row = k*Cp + c_in)
    # hpad_ref: VMEM scratch  (TB, L + 2*pad, Cp) in matmul dtype
    x = x_ref[...]
    TB, L, Cp = x.shape
    vec = vec_ref[...]

    # Zero only the pad fringes; the interior is fully overwritten per conv.
    if pad > 0:
        hpad_ref[:, :pad, :] = jnp.zeros((TB, pad, Cp), hpad_ref.dtype)
        hpad_ref[:, pad + L:, :] = jnp.zeros((TB, pad, Cp), hpad_ref.dtype)

    def conv(h, w_ref, bias_row):
        # Stage h (zero-padded along L) in the matmul dtype, gather the K
        # dilated taps as an im2col matrix and run ONE wide MXU matmul.
        # TODO(synk): for v5e, a pltpu.roll + iota-mask shift would avoid the
        # store/reload round trip and the sublane-unaligned slice reads.
        hpad_ref[:, pad:pad + L, :] = h.astype(hpad_ref.dtype)
        taps = [hpad_ref[:, k * dilation:k * dilation + L, :] for k in range(K)]
        hcat = jnp.concatenate(taps, axis=-1).reshape(TB * L, K * Cp)
        # TODO(synk): chunk the M dimension with lax.fori_loop(unroll=True)
        # when TB*L*Cp*4 approaches the vreg file (256 KiB).
        y = jnp.dot(hcat, w_ref[...], preferred_element_type=jnp.float32)
        return y.reshape(TB, L, Cp) + bias_row[None, None, :]

    h1 = _act(x * vec[0][None, None, :] + vec[1][None, None, :], activation)  # bn1+act
    h2 = _act(conv(h1, w1_ref, vec[2]), activation)   # conv1 (+bn2 pre-folded) + act
    y2 = conv(h2, w2_ref, vec[3])                     # conv2
    o_ref[...] = (y2 + x).astype(o_ref.dtype)         # residual


# -----------------------------------------------------------------------------
# channels-last entry point (preferred for stacked blocks: no transposes)
# -----------------------------------------------------------------------------
def residual_block_channels_last(x_blc, params, *, kernel_size, dilation=1,
                                 activation="relu", batch_tile=None, eps=1e-5,
                                 matmul_dtype=jnp.float32):
    B, L, C = x_blc.shape
    C_out, C_in, K = params["w1"].shape
    assert C_in == C_out == C, "residual add requires in_channels == out_channels"
    assert K == kernel_size
    assert (dilation * (K - 1)) % 2 == 0, "effective kernel must keep length"
    pad = (dilation * (K - 1)) // 2

    LANE = 128
    Cp = ((C + LANE - 1) // LANE) * LANE        # lane-dense channel width

    # eval-mode BatchNorm folded to per-channel scale / shift.
    # TODO(synk): training-mode BN (batch statistics + running-stat update)
    # is not implemented; matches the PyTorch module in .eval() only.
    def fold(g, b, m, v):
        s = g * lax.rsqrt(v + eps)
        return s, b - m * s

    s1, t1 = fold(params["bn1_g"], params["bn1_b"], params["bn1_m"], params["bn1_v"])
    s2, t2 = fold(params["bn2_g"], params["bn2_b"], params["bn2_m"], params["bn2_v"])

    # Fold bn2 into conv1:  bn2(conv1(h)) == conv1(h; w1*s2[out]) + (b1*s2 + t2)
    w1 = params["w1"] * s2[:, None, None]
    b1 = params["b1"] * s2 + t2
    w2, b2 = params["w2"], params["b2"]

    def pack_w(w):  # PyTorch (O, I, K) -> im2col right-matmul (K*Cp, Cp)
        wt = jnp.transpose(w, (2, 1, 0)).astype(jnp.float32)       # (K, I, O)
        wt = jnp.pad(wt, ((0, 0), (0, Cp - C), (0, Cp - C)))
        return wt.reshape(K * Cp, Cp).astype(matmul_dtype)

    w1p, w2p = pack_w(w1), pack_w(w2)

    def pad_c(v):
        return jnp.pad(v.astype(jnp.float32), (0, Cp - C))

    vec = jnp.stack([pad_c(s1), pad_c(t1), pad_c(b1), pad_c(b2)], axis=0)  # (4, Cp)

    # Zero-pad channels; padded channels provably stay zero end-to-end.
    xp = jnp.pad(x_blc.astype(jnp.float32), ((0, 0), (0, 0), (0, Cp - C)))

    # batch tile: keep grid >= 2 when possible (v7x two-TC sharding + pipelining)
    if batch_tile is None:
        TB = B
        if B >= 2:
            for d in range(B // 2, 0, -1):
                if B % d == 0:
                    TB = d
                    break
    else:
        TB = batch_tile
    assert B % TB == 0

    # rough per-grid-step VMEM budget: double-buffered in/out tiles, hpad
    # scratch, weights (double-buffered), plus f32 temporaries headroom.
    itm = jnp.dtype(matmul_dtype).itemsize
    tile_bytes = TB * L * Cp * 4
    est = (8 * tile_bytes
           + TB * (L + 2 * pad) * Cp * itm
           + 2 * 2 * K * Cp * Cp * itm)
    vmem_limit = int(min(64 << 20, max(32 << 20, 2 * est)))

    kern = functools.partial(_residual_block_kernel, K=K, dilation=dilation,
                             pad=pad, activation=activation)

    out = pl.pallas_call(
        kern,
        out_shape=jax.ShapeDtypeStruct((B, L, Cp), jnp.float32),
        grid=(B // TB,),
        in_specs=[
            pl.BlockSpec((TB, L, Cp), lambda b: (b, 0, 0)),
            pl.BlockSpec((4, Cp), lambda b: (0, 0)),
            pl.BlockSpec((K * Cp, Cp), lambda b: (0, 0)),
            pl.BlockSpec((K * Cp, Cp), lambda b: (0, 0)),
        ],
        out_specs=pl.BlockSpec((TB, L, Cp), lambda b: (b, 0, 0)),
        scratch_shapes=[pltpu.VMEM((TB, L + 2 * pad, Cp), matmul_dtype)],
        compiler_params=pltpu.CompilerParams(
            dimension_semantics=("parallel",),
            vmem_limit_bytes=vmem_limit),
    )(xp, vec, w1p, w2p)

    return out[:, :, :C].astype(x_blc.dtype)


# -----------------------------------------------------------------------------
# PyTorch-layout (B, C, L) compatibility wrapper.  For stacked blocks keep
# activations channels-last and call residual_block_channels_last directly
# (avoids the boundary transposes, which are extra HBM round trips).
# -----------------------------------------------------------------------------
def residual_block(x, params, *, kernel_size, dilation=1, activation="relu",
                   batch_tile=None, eps=1e-5, matmul_dtype=jnp.float32):
    x_blc = jnp.transpose(x, (0, 2, 1))                        # (B, L, C)
    y = residual_block_channels_last(
        x_blc, params, kernel_size=kernel_size, dilation=dilation,
        activation=activation, batch_tile=batch_tile, eps=eps,
        matmul_dtype=matmul_dtype)
    return jnp.transpose(y, (0, 2, 1))                         # (B, C, L)


# -----------------------------------------------------------------------------
# pure-JAX reference (eval-mode BN) for correctness checking
# -----------------------------------------------------------------------------
def residual_block_reference(x, params, *, kernel_size, dilation=1,
                             activation="relu", eps=1e-5):
    pad = (dilation * (kernel_size - 1)) // 2

    def bn(h, g, b, m, v):
        return ((h - m[None, :, None]) * lax.rsqrt(v + eps)[None, :, None]
                * g[None, :, None] + b[None, :, None])

    def conv(h, w, b):
        y = lax.conv_general_dilated(
            h, w, window_strides=(1,), padding=[(pad, pad)],
            rhs_dilation=(dilation,), dimension_numbers=("NCH", "OIH", "NCH"))
        return y + b[None, :, None]

    h = _act(bn(x, params["bn1_g"], params["bn1_b"], params["bn1_m"], params["bn1_v"]),
             activation)
    h = conv(h, params["w1"], params["b1"])
    h = _act(bn(h, params["bn2_g"], params["bn2_b"], params["bn2_m"], params["bn2_v"]),
             activation)
    h = conv(h, params["w2"], params["b2"])
    return h + x


# -----------------------------------------------------------------------------
if __name__ == "__main__":
    B, C, L = 4, 32, 64
    kernel_size, dilation = 3, 2

    key = jax.random.PRNGKey(0)
    ks = jax.random.split(key, 14)
    x = jax.random.normal(ks[0], (B, C, L), dtype=jnp.float32)
    params = dict(
        w1=0.1 * jax.random.normal(ks[1], (C, C, kernel_size), jnp.float32),
        b1=0.1 * jax.random.normal(ks[2], (C,), jnp.float32),
        w2=0.1 * jax.random.normal(ks[3], (C, C, kernel_size), jnp.float32),
        b2=0.1 * jax.random.normal(ks[4], (C,), jnp.float32),
        bn1_g=1.0 + 0.1 * jax.random.normal(ks[5], (C,), jnp.float32),
        bn1_b=0.1 * jax.random.normal(ks[6], (C,), jnp.float32),
        bn1_m=0.1 * jax.random.normal(ks[7], (C,), jnp.float32),
        bn1_v=1.0 + 0.1 * jnp.abs(jax.random.normal(ks[8], (C,), jnp.float32)),
        bn2_g=1.0 + 0.1 * jax.random.normal(ks[9], (C,), jnp.float32),
        bn2_b=0.1 * jax.random.normal(ks[10], (C,), jnp.float32),
        bn2_m=0.1 * jax.random.normal(ks[11], (C,), jnp.float32),
        bn2_v=1.0 + 0.1 * jnp.abs(jax.random.normal(ks[12], (C,), jnp.float32)),
    )

    ref = residual_block_reference(x, params, kernel_size=kernel_size,
                                   dilation=dilation, activation="relu")
    ref = jax.block_until_ready(ref)

    # f32 matmul path (bit-faithful to the reference)
    out = residual_block(x, params, kernel_size=kernel_size, dilation=dilation,
                         activation="relu", matmul_dtype=jnp.float32)
    out = jax.block_until_ready(out)
    assert out.shape == x.shape and out.dtype == jnp.float32
    assert jnp.allclose(out, ref, atol=1e-3, rtol=1e-3), \
        f"f32 max abs err {jnp.max(jnp.abs(out - ref))}"

    # bf16 matmul-operand path (v6e/v7x MXU-native), f32 accumulation
    out_bf16 = residual_block(x, params, kernel_size=kernel_size,
                              dilation=dilation, activation="relu",
                              matmul_dtype=jnp.bfloat16)
    out_bf16 = jax.block_until_ready(out_bf16)
    assert jnp.allclose(out_bf16, ref, atol=1e-1, rtol=5e-2), \
        f"bf16 max abs err {jnp.max(jnp.abs(out_bf16 - ref))}"

    print("KERNEL_OK")
</pallas_src>

<mosaic_0001>
module attributes {stable_mosaic.version = 11 : i64} {
  func.func @_residual_block_kernel(%arg0: i32, %arg1: memref<2x64x128xf32, #tpu.memory_space<vmem>>, %arg2: memref<4x128xf32, #tpu.memory_space<vmem>>, %arg3: memref<384x128xf32, #tpu.memory_space<vmem>>, %arg4: memref<384x128xf32, #tpu.memory_space<vmem>>, %arg5: memref<2x64x128xf32, #tpu.memory_space<vmem>>, %arg6: memref<2x68x128xf32, #tpu.memory_space<vmem>>) attributes {dimension_semantics = [#tpu.dimension_semantics<parallel>], iteration_bounds = array<i64: 2>, scalar_prefetch = 0 : i64, scratch_operands = 1 : i64, tpu.core_type = #tpu.core_type<tc>, window_params = [{transform_indices = @transform_0, window_bounds = array<i64: 2, 64, 128>}, {pipeline_mode = #tpu.pipeline_mode<synchronous>, transform_indices = @transform_1, window_bounds = array<i64: 4, 128>}, {pipeline_mode = #tpu.pipeline_mode<synchronous>, transform_indices = @transform_2, window_bounds = array<i64: 384, 128>}, {pipeline_mode = #tpu.pipeline_mode<synchronous>, transform_indices = @transform_3, window_bounds = array<i64: 384, 128>}, {transform_indices = @transform_4, window_bounds = array<i64: 2, 64, 128>}]} {
    %c0 = arith.constant 0 : index
    %c0_0 = arith.constant 0 : index
    %c0_1 = arith.constant 0 : index
    %0 = vector.load %arg1[%c0, %c0_0, %c0_1] : memref<2x64x128xf32, #tpu.memory_space<vmem>>, vector<2x64x128xf32>
    %c0_2 = arith.constant 0 : index
    %c0_3 = arith.constant 0 : index
    %1 = vector.load %arg2[%c0_2, %c0_3] : memref<4x128xf32, #tpu.memory_space<vmem>>, vector<4x128xf32>
    %cst = arith.constant 0.000000e+00 : f32
    %2 = vector.broadcast %cst : f32 to vector<2x2x128xf32>
    %c0_4 = arith.constant 0 : index
    %c0_5 = arith.constant 0 : index
    %c0_6 = arith.constant 0 : index
    %3 = vector.load %arg6[%c0_4, %c0_5, %c0_6] : memref<2x68x128xf32, #tpu.memory_space<vmem>>, vector<2x2x128xf32>
    tpu.vector_store %arg6[%c0_4, %c0_5, %c0_6], %2 {strides = array<i32>} : memref<2x68x128xf32, #tpu.memory_space<vmem>>, vector<2x2x128xf32>,
    %cst_7 = arith.constant 0.000000e+00 : f32
    %4 = vector.broadcast %cst_7 : f32 to vector<2x2x128xf32>
    %c0_8 = arith.constant 0 : index
    %c66 = arith.constant 66 : index
    %c0_9 = arith.constant 0 : index
    %5 = vector.load %arg6[%c0_8, %c66, %c0_9] : memref<2x68x128xf32, #tpu.memory_space<vmem>>, vector<2x2x128xf32>
    tpu.vector_store %arg6[%c0_8, %c66, %c0_9], %4 {strides = array<i32>} : memref<2x68x128xf32, #tpu.memory_space<vmem>>, vector<2x2x128xf32>,
    %6 = vector.extract_strided_slice %1 {offsets = [0, 0], sizes = [1, 128], strides = [1, 1]} : vector<4x128xf32> to vector<1x128xf32>
    %7 = vector.shape_cast %6 : vector<1x128xf32> to vector<128xf32>
    %8 = vector.shape_cast %7 : vector<128xf32> to vector<1x1x128xf32>
    %9 = vector.broadcast %8 : vector<1x1x128xf32> to vector<2x64x128xf32>
    %10 = arith.mulf %0, %9 : vector<2x64x128xf32>
    %11 = vector.extract_strided_slice %1 {offsets = [1, 0], sizes = [1, 128], strides = [1, 1]} : vector<4x128xf32> to vector<1x128xf32>
    %12 = vector.shape_cast %11 : vector<1x128xf32> to vector<128xf32>
    %13 = vector.shape_cast %12 : vector<128xf32> to vector<1x1x128xf32>
    %14 = vector.broadcast %13 : vector<1x1x128xf32> to vector<2x64x128xf32>
    %15 = arith.addf %10, %14 : vector<2x64x128xf32>
    %cst_10 = arith.constant 0.000000e+00 : f32
    %16 = vector.broadcast %cst_10 : f32 to vector<2x64x128xf32>
    %17 = arith.maximumf %15, %16 : vector<2x64x128xf32>
    %18 = vector.extract_strided_slice %1 {offsets = [2, 0], sizes = [1, 128], strides = [1, 1]} : vector<4x128xf32> to vector<1x128xf32>
    %19 = vector.shape_cast %18 : vector<1x128xf32> to vector<128xf32>
    %c0_11 = arith.constant 0 : index
    %c2 = arith.constant 2 : index
    %c0_12 = arith.constant 0 : index
    %20 = vector.load %arg6[%c0_11, %c2, %c0_12] : memref<2x68x128xf32, #tpu.memory_space<vmem>>, vector<2x64x128xf32>
    tpu.vector_store %arg6[%c0_11, %c2, %c0_12], %17 {strides = array<i32>} : memref<2x68x128xf32, #tpu.memory_space<vmem>>, vector<2x64x128xf32>,
    %c0_13 = arith.constant 0 : index
    %c0_14 = arith.constant 0 : index
    %c0_15 = arith.constant 0 : index
    %21 = vector.load %arg6[%c0_13, %c0_14, %c0_15] : memref<2x68x128xf32, #tpu.memory_space<vmem>>, vector<2x64x128xf32>
    %c0_16 = arith.constant 0 : index
    %c2_17 = arith.constant 2 : index
    %c0_18 = arith.constant 0 : index
    %22 = vector.load %arg6[%c0_16, %c2_17, %c0_18] : memref<2x68x128xf32, #tpu.memory_space<vmem>>, vector<2x64x128xf32>
    %c0_19 = arith.constant 0 : index
    %c4 = arith.constant 4 : index
    %c0_20 = arith.constant 0 : index
    %23 = vector.load %arg6[%c0_19, %c4, %c0_20] : memref<2x68x128xf32, #tpu.memory_space<vmem>>, vector<2x64x128xf32>
    %24 = tpu.concatenate %21, %22, %23 in 2 : vector<2x64x128xf32>, vector<2x64x128xf32>, vector<2x64x128xf32> -> vector<2x64x384xf32>
    %25 = vector.shape_cast %24 : vector<2x64x384xf32> to vector<128x384xf32>
    %c0_21 = arith.constant 0 : index
    %c0_22 = arith.constant 0 : index
    %26 = vector.load %arg3[%c0_21, %c0_22] : memref<384x128xf32, #tpu.memory_space<vmem>>, vector<384x128xf32>
    %cst_23 = arith.constant dense<0.000000e+00> : vector<128x128xf32>
    %27 = tpu.matmul %25, %26, %cst_23 {dimension_numbers = #tpu.dot_dimension_numbers<[1], [0], [0], [1], [0, 0, 1, 1], [], []>} : vector<128x384xf32>, vector<384x128xf32>, vector<128x128xf32> -> vector<128x128xf32>
    %28 = vector.shape_cast %27 : vector<128x128xf32> to vector<2x64x128xf32>
    %29 = vector.shape_cast %19 : vector<128xf32> to vector<1x1x128xf32>
    %30 = vector.broadcast %29 : vector<1x1x128xf32> to vector<2x64x128xf32>
    %31 = arith.addf %28, %30 : vector<2x64x128xf32>
    %cst_24 = arith.constant 0.000000e+00 : f32
    %32 = vector.broadcast %cst_24 : f32 to vector<2x64x128xf32>
    %33 = arith.maximumf %31, %32 : vector<2x64x128xf32>
    %34 = vector.extract_strided_slice %1 {offsets = [3, 0], sizes = [1, 128], strides = [1, 1]} : vector<4x128xf32> to vector<1x128xf32>
    %35 = vector.shape_cast %34 : vector<1x128xf32> to vector<128xf32>
    %c0_25 = arith.constant 0 : index
    %c2_26 = arith.constant 2 : index
    %c0_27 = arith.constant 0 : index
    %36 = vector.load %arg6[%c0_25, %c2_26, %c0_27] : memref<2x68x128xf32, #tpu.memory_space<vmem>>, vector<2x64x128xf32>
    tpu.vector_store %arg6[%c0_25, %c2_26, %c0_27], %33 {strides = array<i32>} : memref<2x68x128xf32, #tpu.memory_space<vmem>>, vector<2x64x128xf32>,
    %c0_28 = arith.constant 0 : index
    %c0_29 = arith.constant 0 : index
    %c0_30 = arith.constant 0 : index
    %37 = vector.load %arg6[%c0_28, %c0_29, %c0_30] : memref<2x68x128xf32, #tpu.memory_space<vmem>>, vector<2x64x128xf32>
    %c0_31 = arith.constant 0 : index
    %c2_32 = arith.constant 2 : index
    %c0_33 = arith.constant 0 : index
    %38 = vector.load %arg6[%c0_31, %c2_32, %c0_33] : memref<2x68x128xf32, #tpu.memory_space<vmem>>, vector<2x64x128xf32>
    %c0_34 = arith.constant 0 : index
    %c4_35 = arith.constant 4 : index
    %c0_36 = arith.constant 0 : index
    %39 = vector.load %arg6[%c0_34, %c4_35, %c0_36] : memref<2x68x128xf32, #tpu.memory_space<vmem>>, vector<2x64x128xf32>
    %40 = tpu.concatenate %37, %38, %39 in 2 : vector<2x64x128xf32>, vector<2x64x128xf32>, vector<2x64x128xf32> -> vector<2x64x384xf32>
    %41 = vector.shape_cast %40 : vector<2x64x384xf32> to vector<128x384xf32>
    %c0_37 = arith.constant 0 : index
    %c0_38 = arith.constant 0 : index
    %42 = vector.load %arg4[%c0_37, %c0_38] : memref<384x128xf32, #tpu.memory_space<vmem>>, vector<384x128xf32>
    %cst_39 = arith.constant dense<0.000000e+00> : vector<128x128xf32>
    %43 = tpu.matmul %41, %42, %cst_39 {dimension_numbers = #tpu.dot_dimension_numbers<[1], [0], [0], [1], [0, 0, 1, 1], [], []>} : vector<128x384xf32>, vector<384x128xf32>, vector<128x128xf32> -> vector<128x128xf32>
    %44 = vector.shape_cast %43 : vector<128x128xf32> to vector<2x64x128xf32>
    %45 = vector.shape_cast %35 : vector<128xf32> to vector<1x1x128xf32>
    %46 = vector.broadcast %45 : vector<1x1x128xf32> to vector<2x64x128xf32>
    %47 = arith.addf %44, %46 : vector<2x64x128xf32>
    %48 = arith.addf %47, %0 : vector<2x64x128xf32>
    %c0_40 = arith.constant 0 : index
    %c0_41 = arith.constant 0 : index
    %c0_42 = arith.constant 0 : index
    %49 = vector.load %arg5[%c0_40, %c0_41, %c0_42] : memref<2x64x128xf32, #tpu.memory_space<vmem>>, vector<2x64x128xf32>
    tpu.vector_store %arg5[%c0_40, %c0_41, %c0_42], %48 {strides = array<i32>} : memref<2x64x128xf32, #tpu.memory_space<vmem>>, vector<2x64x128xf32>,
    return
  }
  func.func @transform_0(%arg0: i32) -> (i32, i32, i32) {
    %c0_i32 = arith.constant 0 : i32
    %c0_i32_0 = arith.constant 0 : i32
    %c0_i32_1 = arith.constant 0 : i32
    return %arg0, %c0_i32, %c0_i32_0 : i32, i32, i32
  }
  func.func @transform_1(%arg0: i32) -> (i32, i32) {
    %c0_i32 = arith.constant 0 : i32
    %c0_i32_0 = arith.constant 0 : i32
    %c0_i32_1 = arith.constant 0 : i32
    return %c0_i32, %c0_i32_0 : i32, i32
  }
  func.func @transform_2(%arg0: i32) -> (i32, i32) {
    %c0_i32 = arith.constant 0 : i32
    %c0_i32_0 = arith.constant 0 : i32
    %c0_i32_1 = arith.constant 0 : i32
    return %c0_i32, %c0_i32_0 : i32, i32
  }
  func.func @transform_3(%arg0: i32) -> (i32, i32) {
    %c0_i32 = arith.constant 0 : i32
    %c0_i32_0 = arith.constant 0 : i32
    %c0_i32_1 = arith.constant 0 : i32
    return %c0_i32, %c0_i32_0 : i32, i32
  }
  func.func @transform_4(%arg0: i32) -> (i32, i32, i32) {
    %c0_i32 = arith.constant 0 : i32
    %c0_i32_0 = arith.constant 0 : i32
    %c0_i32_1 = arith.constant 0 : i32
    return %arg0, %c0_i32, %c0_i32_0 : i32, i32, i32
  }
}

</mosaic_0001>

<llo_original>
// kernel: tpu_custom_call.1
$region0: #{tpu_custom_call.1}
  #allocation0 [shape = 'u32[]', space=smem, size = 0x4, offset = 0x4, fixed_abs, tag = 'smem constant byte address 0x4 - core index']
  #allocation1 [shape = 'u32[144,128]{1,0:T(1,128)}', space=vmem, size = 0x12000, scoped, tag = 'internal scratch']
  #allocation2 [shape = 'f32[2,68,128]{2,1,0:T(8,128)}', space=vmem, size = 0x12000, scoped, tag = 'scratch operand']
  %s0 = inlined_call_operand.hbm [shape: f32[4,64,128], index: 0, kind: input, shape index: {}]
  %s1 = inlined_call_operand.hbm [shape: f32[4,128], index: 1, kind: input, shape index: {}]
  %s2 = inlined_call_operand.hbm [shape: f32[384,128], index: 2, kind: input, shape index: {}]
  %s3 = inlined_call_operand.hbm [shape: f32[384,128], index: 3, kind: input, shape index: {}]
  %s4 = inlined_call_operand.hbm [shape: f32[4,64,128], index: 4, kind: output, shape index: {}]
  %s5 = sld [smem:[#allocation0]]
  $region65: #{tpu_custom_call.1} parent=0
    _
  %s7 = ssub.s32 1, %s5
  %s8 = scalar_select 0, %s7, %s5
  $region1: #{tpu_custom_call.1} parent=0
    #allocation3 [shape = 'u8[131072]{0}', space=vmem, size = 0x20000, scoped, tag = 'input window, operand 0']
    #allocation4 [shape = 's32[2]{0}', space=sflag, size = 0x8, scoped, tag = 'scoped memory for tpu_custom_call.1']
    #allocation5 [shape = 's32[2]{0}', space=sflag, size = 0x8, scoped, tag = 'scoped memory for tpu_custom_call.1']
    #allocation6 [shape = 'u8[2048]{0}', space=vmem, size = 0x800, scoped, tag = 'input window, operand 1, single buffered']
    #allocation7 [shape = 's32[1]{0}', space=sflag, size = 0x4, scoped, tag = 'scoped memory for tpu_custom_call.1']
    #allocation8 [shape = 'u8[196608]{0}', space=vmem, size = 0x30000, scoped, tag = 'input window, operand 2, single buffered']
    #allocation9 [shape = 'u8[196608]{0}', space=vmem, size = 0x30000, scoped, tag = 'input window, operand 3, single buffered']
    #allocation10 [shape = 's32[1]{0}', space=sflag, size = 0x4, scoped, tag = 'scoped memory for tpu_custom_call.1']
    #allocation11 [shape = 'u8[131072]{0}', space=vmem, size = 0x20000, scoped, tag = 'output window, operand 0']
    %9 = vsyncpa [#allocation4], 0
    %s10 = scalar_lea.sflag [#allocation4], 1
    %11 = vsyncpa %s10, 0
    %12 = vsyncpa [#allocation7], 0
    %13 = vsyncpa [#allocation10], 0
    %14 = vsyncpa [#allocation5], 0
    %s15 = scalar_lea.sflag [#allocation5], 1
    %16 = vsyncpa %s15, 0
    loop: start=0, step=1, limit=4
    $region2: #{tpu_custom_call.1} parent=1 // loop_pre_header
      _
    $region3: #{tpu_custom_call.1} parent=1 // loop_header
      %s18 = sphi 0, %s22
      %p19 = scmp.ge.s32.totalorder %s18, 4
      %s28 = sphi 0, %s30
      %s31 = sphi 0, %s28
      %s32 = sphi 0, %s31
      %s48 = sphi 0, %s32
      %s52 = sphi 0, %s52
      %s54 = sphi 0, %s52
      %s55 = sphi 0, %s54
      %s69 = sphi 0, %s55
      %s73 = sphi 0, %s73
      %s75 = sphi 0, %s73
      %s76 = sphi 0, %s75
      %s90 = sphi 0, %s76
      %s94 = sphi 0, %s94
      %s96 = sphi 0, %s94
      %s97 = sphi 0, %s96
      %s111 = sphi 0, %s97
      %s117 = sphi 0, %s119
      %s120 = sphi 0, %s117
      %s121 = sphi 0, %s120
      %s137 = sphi 0, %s121
    $region4: #{tpu_custom_call.1} parent=1 // loop_header_branch
      %21 = sbr.rel (%p19) target = $region8
    $region5: #{tpu_custom_call.1} parent=1 // loop_body
      %s23 = ssub.s32 %s18, 1
      %s24 = ssub.s32 %s18, 2
      %s25 = sadd.s32 %s18, 1
      %s26 = ssub.s32 %s18, %s25
      %p27 = scmp.eq.s32.totalorder %s26, 0
      %s29 = sadd.s32 %s28, 1
      %s30 = scalar_select %p27, %s28, %s29
      %p33 = pneg %p27
      %p34 = scmp.eq.s32.totalorder %s18, 1
      %p35 = por %p33, %p34
      %p36 = scmp.ne.s32.totalorder %s28, %s31
      %p37 = scmp.eq.s32.totalorder %s18, 0
      %p38 = por %p36, %p37
      %p39 = scmp.ne.s32.totalorder %s28, %s31
      %p40 = scmp.eq.s32.totalorder %s23, 1
      %p41 = por %p39, %p40
      %p42 = scmp.ne.s32.totalorder %s31, %s32
      %p43 = scmp.eq.s32.totalorder %s23, 0
      %p44 = por %p42, %p43
      %p45 = scmp.ne.s32.totalorder %s31, %s32
      %p46 = scmp.eq.s32.totalorder %s24, 1
      %p47 = por %p45, %p46
      %p49 = scmp.ne.s32.totalorder %s32, %s48
      %p50 = scmp.eq.s32.totalorder %s24, 0
      %p51 = por %p49, %p50
      %s53 = sadd.s32 %s52, 1
      %p56 = scmp.eq.s32.totalorder %s18, 1
      %p57 = scmp.ne.s32.totalorder %s52, %s54
      %p58 = scmp.eq.s32.totalorder %s18, 0
      %p59 = por %p57, %p58
      %p60 = scmp.ne.s32.totalorder %s52, %s54
      %p61 = scmp.eq.s32.totalorder %s23, 1
      %p62 = por %p60, %p61
      %p63 = scmp.ne.s32.totalorder %s54, %s55
      %p64 = scmp.eq.s32.totalorder %s23, 0
      %p65 = por %p63, %p64
      %p66 = scmp.ne.s32.totalorder %s54, %s55
      %p67 = scmp.eq.s32.totalorder %s24, 1
      %p68 = por %p66, %p67
      %p70 = scmp.ne.s32.totalorder %s55, %s69
      %p71 = scmp.eq.s32.totalorder %s24, 0
      %p72 = por %p70, %p71
      %s74 = sadd.s32 %s73, 1
      %p77 = scmp.eq.s32.totalorder %s18, 1
      %p78 = scmp.ne.s32.totalorder %s73, %s75
      %p79 = scmp.eq.s32.totalorder %s18, 0
      %p80 = por %p78, %p79
      %p81 = scmp.ne.s32.totalorder %s73, %s75
      %p82 = scmp.eq.s32.totalorder %s23, 1
      %p83 = por %p81, %p82
      %p84 = scmp.ne.s32.totalorder %s75, %s76
      %p85 = scmp.eq.s32.totalorder %s23, 0
      %p86 = por %p84, %p85
      %p87 = scmp.ne.s32.totalorder %s75, %s76
      %p88 = scmp.eq.s32.totalorder %s24, 1
      %p89 = por %p87, %p88
      %p91 = scmp.ne.s32.totalorder %s76, %s90
      %p92 = scmp.eq.s32.totalorder %s24, 0
      %p93 = por %p91, %p92
      %s95 = sadd.s32 %s94, 1
      %p98 = scmp.eq.s32.totalorder %s18, 1
      %p99 = scmp.ne.s32.totalorder %s94, %s96
      %p100 = scmp.eq.s32.totalorder %s18, 0
      %p101 = por %p99, %p100
      %p102 = scmp.ne.s32.totalorder %s94, %s96
      %p103 = scmp.eq.s32.totalorder %s23, 1
      %p104 = por %p102, %p103
      %p105 = scmp.ne.s32.totalorder %s96, %s97
      %p106 = scmp.eq.s32.totalorder %s23, 0
      %p107 = por %p105, %p106
      %p108 = scmp.ne.s32.totalorder %s96, %s97
      %p109 = scmp.eq.s32.totalorder %s24, 1
      %p110 = por %p108, %p109
      %p112 = scmp.ne.s32.totalorder %s97, %s111
      %p113 = scmp.eq.s32.totalorder %s24, 0
      %p114 = por %p112, %p113
      %s115 = ssub.s32 %s18, %s25
      %p116 = scmp.eq.s32.totalorder %s115, 0
      %s118 = sadd.s32 %s117, 1
      %s119 = scalar_select %p116, %s117, %s118
      %p122 = pneg %p116
      %p123 = scmp.eq.s32.totalorder %s18, 1
      %p124 = por %p122, %p123
      %p125 = scmp.ne.s32.totalorder %s117, %s120
      %p126 = scmp.eq.s32.totalorder %s18, 0
      %p127 = por %p125, %p126
      %p128 = scmp.ne.s32.totalorder %s117, %s120
      %p129 = scmp.eq.s32.totalorder %s23, 1
      %p130 = por %p128, %p129
      %p131 = scmp.ne.s32.totalorder %s120, %s121
      %p132 = scmp.eq.s32.totalorder %s23, 0
      %p133 = por %p131, %p132
      %p134 = scmp.ne.s32.totalorder %s120, %s121
      %p135 = scmp.eq.s32.totalorder %s24, 1
      %p136 = por %p134, %p135
      %p138 = scmp.ne.s32.totalorder %s121, %s137
      %p139 = scmp.eq.s32.totalorder %s24, 0
      %p140 = por %p138, %p139
      %p141 = scmp.le.s32.totalorder 1, %s18
      %p142 = scmp.lt.s32.totalorder %s18, 3
      %p143 = pnand %p141, %p142
      %p144 = pneg %p143
      // Predicated region
      $region9: #{tpu_custom_call.1} parent=5 // pred_check
        _
      $region10: #{tpu_custom_call.1} parent=5 // pred_check_branch
        %146 = sbr.rel (%p143) target = $region12
      $region11: #{tpu_custom_call.1} parent=5 // pred_region
        %s147 = ssub.s32 %s18, 1
        // Predicated region
        $region13: #{tpu_custom_call.1} parent=11 // pred_check
          %p148 = pneg %p65
        $region14: #{tpu_custom_call.1} parent=11 // pred_check_branch
          %150 = sbr.rel (%p148) target = $region16
        $region15: #{tpu_custom_call.1} parent=11 // pred_region
          %s152 = ssub.s32 64, 64
          %153 = vsyncadd [#allocation7], %s152
          %s155 = sshll.u32 [#allocation6], 4
          %s156 = int_to_ptr.vmem [resolvable:$true] %s155
          %158 = dma.hbm_to_vmem [thread:$0]  %s1, 64, %s156, [#allocation7]
        $region16: #{tpu_custom_call.1} parent=11 // pred_fallthru
          _
        // Predicated region
        $region17: #{tpu_custom_call.1} parent=11 // pred_check
          %p159 = pneg %p86
        $region18: #{tpu_custom_call.1} parent=11 // pred_check_branch
          %161 = sbr.rel (%p159) target = $region20
        $region19: #{tpu_custom_call.1} parent=11 // pred_region
          %s163 = ssub.s32 6144, 6144
          %164 = vsyncadd [#allocation7], %s163
          %s165 = sshll.u32 [#allocation8], 4
          %s166 = int_to_ptr.vmem [resolvable:$true] %s165
          %171 = dma.hbm_to_vmem [thread:$0]  %s2, 6144, %s166, [#allocation7], 128, 128, 8
        $region20: #{tpu_custom_call.1} parent=11 // pred_fallthru
          _
        // Predicated region
        $region21: #{tpu_custom_call.1} parent=11 // pred_check
          %p172 = pneg %p107
        $region22: #{tpu_custom_call.1} parent=11 // pred_check_branch
          %174 = sbr.rel (%p172) target = $region24
        $region23: #{tpu_custom_call.1} parent=11 // pred_region
          %s176 = ssub.s32 6144, 6144
          %177 = vsyncadd [#allocation10], %s176
          %s178 = sshll.u32 [#allocation9], 4
          %s179 = int_to_ptr.vmem [resolvable:$true] %s178
          %184 = dma.hbm_to_vmem [thread:$0]  %s3, 6144, %s179, [#allocation10], 128, 128, 8
        $region24: #{tpu_custom_call.1} parent=11 // pred_fallthru
          _
      $region12: #{tpu_custom_call.1} parent=5 // pred_fallthru
        _
      %p185 = scmp.lt.s32.totalorder %s18, 2
      // Predicated region
      $region25: #{tpu_custom_call.1} parent=5 // pred_check
        %p186 = pneg %p185
      $region26: #{tpu_custom_call.1} parent=5 // pred_check_branch
        %188 = sbr.rel (%p186) target = $region28
      $region27: #{tpu_custom_call.1} parent=5 // pred_region
        // Predicated region
        $region29: #{tpu_custom_call.1} parent=27 // pred_check
          %p189 = pneg %p38
        $region30: #{tpu_custom_call.1} parent=27 // pred_check_branch
          %191 = sbr.rel (%p189) target = $region32
        $region31: #{tpu_custom_call.1} parent=27 // pred_region
          %s192 = sand.u32 %s28, 1
          %s193 = scalar_lea.sflag [#allocation4], %s192
          %s194 = sand.u32 %s28, 1
          %s195 = smul.addr %s194, 128
          %s196 = scalar_lea.vmem [#allocation3], %s195
          %s197 = smul.u32 2, %s18
          %s199 = ssub.s32 2048, 2048
          %200 = vsyncadd %s193, %s199
          %s201 = smul.addr %s197, 8
          %s202 = smul.addr %s201, 128
          %s203 = scalar_lea.hbm %s0, %s202
          %s204 = sshll.u32 %s196, 4
          %s205 = int_to_ptr.vmem [resolvable:$true] %s204
          %210 = dma.hbm_to_vmem [thread:$0]  %s203, 2048, %s205, %s193, 128, 128, 8
        $region32: #{tpu_custom_call.1} parent=27 // pred_fallthru
          _
      $region28: #{tpu_custom_call.1} parent=5 // pred_fallthru
        _
      %p211 = scmp.le.s32.totalorder 1, %s18
      %p212 = scmp.lt.s32.totalorder %s18, 3
      %p213 = pnand %p211, %p212
      %p214 = pneg %p213
      // Predicated region
      $region33: #{tpu_custom_call.1} parent=5 // pred_check
        _
      $region34: #{tpu_custom_call.1} parent=5 // pred_check_branch
        %216 = sbr.rel (%p213) target = $region36
      $region35: #{tpu_custom_call.1} parent=5 // pred_region
        %s217 = ssub.s32 %s18, 1
        %s218 = sand.u32 %s31, 1
        %s219 = scalar_lea.sflag [#allocation4], %s218
        %s220 = sand.u32 %s31, 1
        %s221 = smul.addr %s220, 128
        %s222 = scalar_lea.vmem [#allocation3], %s221
        // Predicated region
        $region37: #{tpu_custom_call.1} parent=35 // pred_check
          %p223 = pneg %p44
        $region38: #{tpu_custom_call.1} parent=35 // pred_check_branch
          %225 = sbr.rel (%p223) target = $region40
        $region39: #{tpu_custom_call.1} parent=35 // pred_region
          %226 = dma.done %s219, 2048
        $region40: #{tpu_custom_call.1} parent=35 // pred_fallthru
          _
        // Predicated region
        $region41: #{tpu_custom_call.1} parent=35 // pred_check
          %p227 = pneg %p65
        $region42: #{tpu_custom_call.1} parent=35 // pred_check_branch
          %229 = sbr.rel (%p227) target = $region44
        $region43: #{tpu_custom_call.1} parent=35 // pred_region
          %230 = dma.done [#allocation7], 64
        $region44: #{tpu_custom_call.1} parent=35 // pred_fallthru
          _
        // Predicated region
        $region45: #{tpu_custom_call.1} parent=35 // pred_check
          %p231 = pneg %p86
        $region46: #{tpu_custom_call.1} parent=35 // pred_check_branch
          %233 = sbr.rel (%p231) target = $region48
        $region47: #{tpu_custom_call.1} parent=35 // pred_region
          %234 = dma.done [#allocation7], 6144
        $region48: #{tpu_custom_call.1} parent=35 // pred_fallthru
          _
        // Predicated region
        $region49: #{tpu_custom_call.1} parent=35 // pred_check
          %p235 = pneg %p107
        $region50: #{tpu_custom_call.1} parent=35 // pred_check_branch
          %237 = sbr.rel (%p235) target = $region52
        $region51: #{tpu_custom_call.1} parent=35 // pred_region
          %238 = dma.done [#allocation10], 6144
        $region52: #{tpu_custom_call.1} parent=35 // pred_fallthru
          _
        %s239 = sand.u32 %s31, 1
        %s240 = scalar_lea.sflag [#allocation4], %s239
        %s241 = sand.u32 %s31, 1
        %s242 = smul.addr %s241, 128
        %s243 = scalar_lea.vmem [#allocation3], %s242
        %p244 = pneg %p44
        %p245 = pneg %p41
        %p246 = pneg %p65
        %p247 = pneg %p62
        %p248 = pneg %p86
        %p249 = pneg %p83
        %p250 = pneg %p107
        %p251 = pneg %p104
        %p252 = pneg %p133
        %p253 = pneg %p130
        %s254 = sand.u32 %s120, 1
        %s255 = scalar_lea.sflag [#allocation5], %s254
        %s256 = sand.u32 %s120, 1
        %s257 = smul.addr %s256, 128
        %s258 = scalar_lea.vmem [#allocation11], %s257
        %s259 = smul.u32 2, %s23
        %s260 = smul.u32 2, %s23
        %v261 = vld [vmem:[%s222] sm:$0xff]
        %v262 = vld [vmem:[%s222 + $0x8] sm:$0xff]
        %v263 = vld [vmem:[%s222 + $0x10] sm:$0xff]
        %v264 = vld [vmem:[%s222 + $0x18] sm:$0xff]
        %v265 = vld [vmem:[%s222 + $0x20] sm:$0xff]
        %v266 = vld [vmem:[%s222 + $0x28] sm:$0xff]
        %v267 = vld [vmem:[%s222 + $0x30] sm:$0xff]
        %v268 = vld [vmem:[%s222 + $0x38] sm:$0xff]
        %v269 = vld [vmem:[%s222 + $0x40] sm:$0xff]
        %v270 = vld [vmem:[%s222 + $0x48] sm:$0xff]
        %v271 = vld [vmem:[%s222 + $0x50] sm:$0xff]
        %v272 = vld [vmem:[%s222 + $0x58] sm:$0xff]
        %v273 = vld [vmem:[%s222 + $0x60] sm:$0xff]
        %v274 = vld [vmem:[%s222 + $0x68] sm:$0xff]
        %v275 = vld [vmem:[%s222 + $0x70] sm:$0xff]
        %v276 = vld [vmem:[%s222 + $0x78] sm:$0xff]
        %v277 = vld [vmem:[#allocation6] sm:$0xf]
        %278 = vst [vmem:[#allocation2] sm:$0x3] 0.0
        %279 = vst [vmem:[#allocation2 + $0x48] sm:$0x3] 0.0
        %280 = vst [vmem:[#allocation2 + $0x42] sm:$0x3] 0.0
        %281 = vst [vmem:[#allocation2 + $0x8a] sm:$0x3] 0.0
        %v282 = vlaneseq
        %v283 = vshrl.u32 %v282, 7
        %v284 = vsub.s32 0, %v283
        %v285 = vrot.slane %v277, %v284
        %v286 = vmul.f32 %v261, %v285
        %v287 = vmul.f32 %v262, %v285
        %v288 = vmul.f32 %v263, %v285
        %v289 = vmul.f32 %v264, %v285
        %v290 = vmul.f32 %v265, %v285
        %v291 = vmul.f32 %v266, %v285
        %v292 = vmul.f32 %v267, %v285
        %v293 = vmul.f32 %v268, %v285
        %v294 = vmul.f32 %v269, %v285
        %v295 = vmul.f32 %v270, %v285
        %v296 = vmul.f32 %v271, %v285
        %v297 = vmul.f32 %v272, %v285
        %v298 = vmul.f32 %v273, %v285
        %v299 = vmul.f32 %v274, %v285
        %v300 = vmul.f32 %v275, %v285
        %v301 = vmul.f32 %v276, %v285
        %v302 = vlaneseq
        %v303 = vshrl.u32 %v302, 7
        %v304 = vsub.s32 1, %v303
        %v305 = vrot.slane %v277, %v304
        %v306 = vadd.f32 %v286, %v305
        %v307 = vadd.f32 %v287, %v305
        %v308 = vadd.f32 %v288, %v305
        %v309 = vadd.f32 %v289, %v305
        %v310 = vadd.f32 %v290, %v305
        %v311 = vadd.f32 %v291, %v305
        %v312 = vadd.f32 %v292, %v305
        %v313 = vadd.f32 %v293, %v305
        %v314 = vadd.f32 %v294, %v305
        %v315 = vadd.f32 %v295, %v305
        %v316 = vadd.f32 %v296, %v305
        %v317 = vadd.f32 %v297, %v305
        %v318 = vadd.f32 %v298, %v305
        %v319 = vadd.f32 %v299, %v305
        %v320 = vadd.f32 %v300, %v305
        %v321 = vadd.f32 %v301, %v305
        %v322 = vmax.f32 %v306, 0.0
        %v323 = vmax.f32 %v307, 0.0
        %v324 = vmax.f32 %v308, 0.0
        %v325 = vmax.f32 %v309, 0.0
        %v326 = vmax.f32 %v310, 0.0
        %v327 = vmax.f32 %v311, 0.0
        %v328 = vmax.f32 %v312, 0.0
        %v329 = vmax.f32 %v313, 0.0
        %v330 = vmax.f32 %v314, 0.0
        %v331 = vmax.f32 %v315, 0.0
        %v332 = vmax.f32 %v316, 0.0
        %v333 = vmax.f32 %v317, 0.0
        %v334 = vmax.f32 %v318, 0.0
        %v335 = vmax.f32 %v319, 0.0
        %v336 = vmax.f32 %v320, 0.0
        %v337 = vmax.f32 %v321, 0.0
        %338 = vst [vmem:[#allocation2 + $0x2] sm:$0xff] %v322
        %339 = vst [vmem:[#allocation2 + $0xa] sm:$0xff] %v323
        %340 = vst [vmem:[#allocation2 + $0x12] sm:$0xff] %v324
        %341 = vst [vmem:[#allocation2 + $0x1a] sm:$0xff] %v325
        %342 = vst [vmem:[#allocation2 + $0x22] sm:$0xff] %v326
        %343 = vst [vmem:[#allocation2 + $0x2a] sm:$0xff] %v327
        %344 = vst [vmem:[#allocation2 + $0x32] sm:$0xff] %v328
        %345 = vst [vmem:[#allocation2 + $0x3a] sm:$0xff] %v329
        %346 = vst [vmem:[#allocation2 + $0x4a] sm:$0xff] %v330
        %347 = vst [vmem:[#allocation2 + $0x52] sm:$0xff] %v331
        %348 = vst [vmem:[#allocation2 + $0x5a] sm:$0xff] %v332
        %349 = vst [vmem:[#allocation2 + $0x62] sm:$0xff] %v333
        %350 = vst [vmem:[#allocation2 + $0x6a] sm:$0xff] %v334
        %351 = vst [vmem:[#allocation2 + $0x72] sm:$0xff] %v335
        %352 = vst [vmem:[#allocation2 + $0x7a] sm:$0xff] %v336
        %353 = vst [vmem:[#allocation2 + $0x82] sm:$0xff] %v337
        %v354 = vld [vmem:[#allocation2] sm:$0xff]
        %v355 = vld [vmem:[#allocation2 + $0x8] sm:$0xff]
        %v356 = vld [vmem:[#allocation2 + $0x10] sm:$0xff]
        %v357 = vld [vmem:[#allocation2 + $0x18] sm:$0xff]
        %v358 = vld [vmem:[#allocation2 + $0x20] sm:$0xff]
        %v359 = vld [vmem:[#allocation2 + $0x28] sm:$0xff]
        %v360 = vld [vmem:[#allocation2 + $0x30] sm:$0xff]
        %v361 = vld [vmem:[#allocation2 + $0x38] sm:$0xff]
        %v362 = vld [vmem:[#allocation2 + $0x48] sm:$0xff]
        %v363 = vld [vmem:[#allocation2 + $0x50] sm:$0xff]
        %v364 = vld [vmem:[#allocation2 + $0x58] sm:$0xff]
        %v365 = vld [vmem:[#allocation2 + $0x60] sm:$0xff]
        %v366 = vld [vmem:[#allocation2 + $0x68] sm:$0xff]
        %v367 = vld [vmem:[#allocation2 + $0x70] sm:$0xff]
        %v368 = vld [vmem:[#allocation2 + $0x78] sm:$0xff]
        %v369 = vld [vmem:[#allocation2 + $0x80] sm:$0xff]
        %v370 = vld [vmem:[#allocation2 + $0x2] sm:$0xff]
        %v371 = vld [vmem:[#allocation2 + $0xa] sm:$0xff]
        %v372 = vld [vmem:[#allocation2 + $0x12] sm:$0xff]
        %v373 = vld [vmem:[#allocation2 + $0x1a] sm:$0xff]
        %v374 = vld [vmem:[#allocation2 + $0x22] sm:$0xff]
        %v375 = vld [vmem:[#allocation2 + $0x2a] sm:$0xff]
        %v376 = vld [vmem:[#allocation2 + $0x32] sm:$0xff]
        %v377 = vld [vmem:[#allocation2 + $0x3a] sm:$0xff]
        %v378 = vld [vmem:[#allocation2 + $0x4a] sm:$0xff]
        %v379 = vld [vmem:[#allocation2 + $0x52] sm:$0xff]
        %v380 = vld [vmem:[#allocation2 + $0x5a] sm:$0xff]
        %v381 = vld [vmem:[#allocation2 + $0x62] sm:$0xff]
        %v382 = vld [vmem:[#allocation2 + $0x6a] sm:$0xff]
        %v383 = vld [vmem:[#allocation2 + $0x72] sm:$0xff]
        %v384 = vld [vmem:[#allocation2 + $0x7a] sm:$0xff]
        %v385 = vld [vmem:[#allocation2 + $0x82] sm:$0xff]
        %v386 = vld [vmem:[#allocation2 + $0x4] sm:$0xff]
        %v387 = vld [vmem:[#allocation2 + $0xc] sm:$0xff]
        %v388 = vld [vmem:[#allocation2 + $0x14] sm:$0xff]
        %v389 = vld [vmem:[#allocation2 + $0x1c] sm:$0xff]
        %v390 = vld [vmem:[#allocation2 + $0x24] sm:$0xff]
        %v391 = vld [vmem:[#allocation2 + $0x2c] sm:$0xff]
        %v392 = vld [vmem:[#allocation2 + $0x34] sm:$0xff]
        %v393 = vld [vmem:[#allocation2 + $0x3c] sm:$0xff]
        %v394 = vld [vmem:[#allocation2 + $0x4c] sm:$0xff]
        %v395 = vld [vmem:[#allocation2 + $0x54] sm:$0xff]
        %v396 = vld [vmem:[#allocation2 + $0x5c] sm:$0xff]
        %v397 = vld [vmem:[#allocation2 + $0x64] sm:$0xff]
        %v398 = vld [vmem:[#allocation2 + $0x6c] sm:$0xff]
        %v399 = vld [vmem:[#allocation2 + $0x74] sm:$0xff]
        %v400 = vld [vmem:[#allocation2 + $0x7c] sm:$0xff]
        %v401 = vld [vmem:[#allocation2 + $0x84] sm:$0xff]
        %v402 = vld [vmem:[#allocation8] sm:$0xff]
        %v403 = vld [vmem:[#allocation8 + $0x8] sm:$0xff]
        %v404 = vld [vmem:[#allocation8 + $0x10] sm:$0xff]
        %v405 = vld [vmem:[#allocation8 + $0x18] sm:$0xff]
        %v406 = vld [vmem:[#allocation8 + $0x20] sm:$0xff]
        %v407 = vld [vmem:[#allocation8 + $0x28] sm:$0xff]
        %v408 = vld [vmem:[#allocation8 + $0x30] sm:$0xff]
        %v409 = vld [vmem:[#allocation8 + $0x38] sm:$0xff]
        %v410 = vld [vmem:[#allocation8 + $0x40] sm:$0xff]
        %v411 = vld [vmem:[#allocation8 + $0x48] sm:$0xff]
        %v412 = vld [vmem:[#allocation8 + $0x50] sm:$0xff]
        %v413 = vld [vmem:[#allocation8 + $0x58] sm:$0xff]
        %v414 = vld [vmem:[#allocation8 + $0x60] sm:$0xff]
        %v415 = vld [vmem:[#allocation8 + $0x68] sm:$0xff]
        %v416 = vld [vmem:[#allocation8 + $0x70] sm:$0xff]
        %v417 = vld [vmem:[#allocation8 + $0x78] sm:$0xff]
        %v418 = vld [vmem:[#allocation8 + $0x80] sm:$0xff]
        %v419 = vld [vmem:[#allocation8 + $0x88] sm:$0xff]
        %v420 = vld [vmem:[#allocation8 + $0x90] sm:$0xff]
        %v421 = vld [vmem:[#allocation8 + $0x98] sm:$0xff]
        %v422 = vld [vmem:[#allocation8 + $0xa0] sm:$0xff]
        %v423 = vld [vmem:[#allocation8 + $0xa8] sm:$0xff]
        %v424 = vld [vmem:[#allocation8 + $0xb0] sm:$0xff]
        %v425 = vld [vmem:[#allocation8 + $0xb8] sm:$0xff]
        %v426 = vld [vmem:[#allocation8 + $0xc0] sm:$0xff]
        %v427 = vld [vmem:[#allocation8 + $0xc8] sm:$0xff]
        %v428 = vld [vmem:[#allocation8 + $0xd0] sm:$0xff]
        %v429 = vld [vmem:[#allocation8 + $0xd8] sm:$0xff]
        %v430 = vld [vmem:[#allocation8 + $0xe0] sm:$0xff]
        %v431 = vld [vmem:[#allocation8 + $0xe8] sm:$0xff]
        %v432 = vld [vmem:[#allocation8 + $0xf0] sm:$0xff]
        %v433 = vld [vmem:[#allocation8 + $0xf8] sm:$0xff]
        %v434 = vld [vmem:[#allocation8 + $0x100] sm:$0xff]
        %v435 = vld [vmem:[#allocation8 + $0x108] sm:$0xff]
        %v436 = vld [vmem:[#allocation8 + $0x110] sm:$0xff]
        %v437 = vld [vmem:[#allocation8 + $0x118] sm:$0xff]
        %v438 = vld [vmem:[#allocation8 + $0x120] sm:$0xff]
        %v439 = vld [vmem:[#allocation8 + $0x128] sm:$0xff]
        %v440 = vld [vmem:[#allocation8 + $0x130] sm:$0xff]
        %v441 = vld [vmem:[#allocation8 + $0x138] sm:$0xff]
        %v442 = vld [vmem:[#allocation8 + $0x140] sm:$0xff]
        %v443 = vld [vmem:[#allocation8 + $0x148] sm:$0xff]
        %v444 = vld [vmem:[#allocation8 + $0x150] sm:$0xff]
        %v445 = vld [vmem:[#allocation8 + $0x158] sm:$0xff]
        %v446 = vld [vmem:[#allocation8 + $0x160] sm:$0xff]
        %v447 = vld [vmem:[#allocation8 + $0x168] sm:$0xff]
        %v448 = vld [vmem:[#allocation8 + $0x170] sm:$0xff]
        %v449 = vld [vmem:[#allocation8 + $0x178] sm:$0xff]
        %450 = vmatprep.subr.mxu0 0.0
        %451 = vmatpush1.msra.mxu0 %v402
        %452 = vmatprep.subr.mxu0 0.0
        %453 = vmatpush1.msra.mxu0 %v403
        %454 = vmatprep.subr.mxu0 0.0
        %455 = vmatpush1.msra.mxu0 %v404
        %456 = vmatprep.subr.mxu0 0.0
        %457 = vmatpush1.msra.mxu0 %v405
        %458 = vmatprep.subr.mxu0 0.0
        %459 = vmatpush1.msra.mxu0 %v406
        %460 = vmatprep.subr.mxu0 0.0
        %461 = vmatpush1.msra.mxu0 %v407
        %462 = vmatprep.subr.mxu0 0.0
        %463 = vmatpush1.msra.mxu0 %v408
        %464 = vmatprep.subr.mxu0 0.0
        %465 = vmatpush1.msra.mxu0 %v409
        %466 = vmatprep.subr.mxu0 0.0
        %467 = vmatpush1.msra.mxu0 %v410
        %468 = vmatprep.subr.mxu0 0.0
        %469 = vmatpush1.msra.mxu0 %v411
        %470 = vmatprep.subr.mxu0 0.0
        %471 = vmatpush1.msra.mxu0 %v412
        %472 = vmatprep.subr.mxu0 0.0
        %473 = vmatpush1.msra.mxu0 %v413
        %474 = vmatprep.subr.mxu0 0.0
        %475 = vmatpush1.msra.mxu0 %v414
        %476 = vmatprep.subr.mxu0 0.0
        %477 = vmatpush1.msra.mxu0 %v415
        %478 = vmatprep.subr.mxu0 0.0
        %479 = vmatpush1.msra.mxu0 %v416
        %480 = vmatprep.subr.mxu0 0.0
        %481 = vmatpush1.msra.mxu0 %v417
        %482 = vmatprep.subr.mxu0 0.0
        %483 = vmatpush1.msra.mxu0 %v418
        %484 = vmatprep.subr.mxu0 0.0
        %485 = vmatpush1.msra.mxu0 %v419
        %486 = vmatprep.subr.mxu0 0.0
        %487 = vmatpush1.msra.mxu0 %v420
        %488 = vmatprep.subr.mxu0 0.0
        %489 = vmatpush1.msra.mxu0 %v421
        %490 = vmatprep.subr.mxu0 0.0
        %491 = vmatpush1.msra.mxu0 %v422
        %492 = vmatprep.subr.mxu0 0.0
        %493 = vmatpush1.msra.mxu0 %v423
        %494 = vmatprep.subr.mxu0 0.0
        %495 = vmatpush1.msra.mxu0 %v424
        %496 = vmatprep.subr.mxu0 0.0
        %497 = vmatpush1.msra.mxu0 %v425
        %498 = vmatprep.subr.mxu0 0.0
        %499 = vmatpush1.msra.mxu0 %v426
        %500 = vmatprep.subr.mxu0 0.0
        %501 = vmatpush1.msra.mxu0 %v427
        %502 = vmatprep.subr.mxu0 0.0
        %503 = vmatpush1.msra.mxu0 %v428
        %504 = vmatprep.subr.mxu0 0.0
        %505 = vmatpush1.msra.mxu0 %v429
        %506 = vmatprep.subr.mxu0 0.0
        %507 = vmatpush1.msra.mxu0 %v430
        %508 = vmatprep.subr.mxu0 0.0
        %509 = vmatpush1.msra.mxu0 %v431
        %510 = vmatprep.subr.mxu0 0.0
        %511 = vmatpush1.msra.mxu0 %v432
        %512 = vmatprep.subr.mxu0 0.0
        %513 = vmatpush1.msra.mxu0 %v433
        %514 = vmatprep.mubr.f32.mxu0 %v370
        %515 = vmatmul.mubr.f32.gmra.mrb[0].mxu0 %v354
        %v516 = vpop.f32.mrb[0].mxu0
        %v517 = vadd.f32 0.0, %v516
        %v518 = vpop.f32.mrb[0].mxu0
        %519 = vmatprep.mubr.f32.mxu0 %v371
        %520 = vmatmul.mubr.f32.gmra.mrb[0].mxu0 %v355
        %v521 = vpop.f32.mrb[0].mxu0
        %v522 = vadd.f32 0.0, %v521
        %v523 = vpop.f32.mrb[0].mxu0
        %524 = vmatprep.mubr.f32.mxu0 %v372
        %525 = vmatmul.mubr.f32.gmra.mrb[0].mxu0 %v356
        %v526 = vpop.f32.mrb[0].mxu0
        %v527 = vadd.f32 0.0, %v526
        %v528 = vpop.f32.mrb[0].mxu0
        %529 = vmatprep.mubr.f32.mxu0 %v373
        %530 = vmatmul.mubr.f32.gmra.mrb[0].mxu0 %v357
        %v531 = vpop.f32.mrb[0].mxu0
        %v532 = vadd.f32 0.0, %v531
        %v533 = vpop.f32.mrb[0].mxu0
        %534 = vmatprep.mubr.f32.mxu0 %v374
        %535 = vmatmul.mubr.f32.gmra.mrb[0].mxu0 %v358
        %v536 = vpop.f32.mrb[0].mxu0
        %v537 = vadd.f32 0.0, %v536
        %v538 = vpop.f32.mrb[0].mxu0
        %539 = vmatprep.mubr.f32.mxu0 %v375
        %540 = vmatmul.mubr.f32.gmra.mrb[0].mxu0 %v359
        %v541 = vpop.f32.mrb[0].mxu0
        %v542 = vadd.f32 0.0, %v541
        %v543 = vpop.f32.mrb[0].mxu0
        %544 = vmatprep.mubr.f32.mxu0 %v376
        %545 = vmatmul.mubr.f32.gmra.mrb[0].mxu0 %v360
        %v546 = vpop.f32.mrb[0].mxu0
        %v547 = vadd.f32 0.0, %v546
        %v548 = vpop.f32.mrb[0].mxu0
        %549 = vmatprep.mubr.f32.mxu0 %v377
        %550 = vmatmul.mubr.f32.gmra.mrb[0].mxu0 %v361
        %v551 = vpop.f32.mrb[0].mxu0
        %v552 = vadd.f32 0.0, %v551
        %v553 = vpop.f32.mrb[0].mxu0
        %554 = vmatprep.mubr.f32.mxu0 %v378
        %555 = vmatmul.mubr.f32.gmra.mrb[0].mxu0 %v362
        %v556 = vpop.f32.mrb[0].mxu0
        %v557 = vadd.f32 0.0, %v556
        %v558 = vpop.f32.mrb[0].mxu0
        %559 = vmatprep.mubr.f32.mxu0 %v379
        %560 = vmatmul.mubr.f32.gmra.mrb[0].mxu0 %v363
        %v561 = vpop.f32.mrb[0].mxu0
        %v562 = vadd.f32 0.0, %v561
        %v563 = vpop.f32.mrb[0].mxu0
        %564 = vmatprep.mubr.f32.mxu0 %v380
        %565 = vmatmul.mubr.f32.gmra.mrb[0].mxu0 %v364
        %v566 = vpop.f32.mrb[0].mxu0
        %v567 = vadd.f32 0.0, %v566
        %v568 = vpop.f32.mrb[0].mxu0
        %569 = vmatprep.mubr.f32.mxu0 %v381
        %570 = vmatmul.mubr.f32.gmra.mrb[0].mxu0 %v365
        %v571 = vpop.f32.mrb[0].mxu0
        %v572 = vadd.f32 0.0, %v571
        %v573 = vpop.f32.mrb[0].mxu0
        %574 = vmatprep.mubr.f32.mxu0 %v382
        %575 = vmatmul.mubr.f32.gmra.mrb[0].mxu0 %v366
        %v576 = vpop.f32.mrb[0].mxu0
        %v577 = vadd.f32 0.0, %v576
        %v578 = vpop.f32.mrb[0].mxu0
        %579 = vmatprep.mubr.f32.mxu0 %v383
        %580 = vmatmul.mubr.f32.gmra.mrb[0].mxu0 %v367
        %v581 = vpop.f32.mrb[0].mxu0
        %v582 = vadd.f32 0.0, %v581
        %v583 = vpop.f32.mrb[0].mxu0
        %584 = vmatprep.mubr.f32.mxu0 %v384
        %585 = vmatmul.mubr.f32.gmra.mrb[0].mxu0 %v368
        %v586 = vpop.f32.mrb[0].mxu0
        %v587 = vadd.f32 0.0, %v586
        %v588 = vpop.f32.mrb[0].mxu0
        %589 = vmatprep.mubr.f32.mxu0 %v385
        %590 = vmatmul.mubr.f32.gmra.mrb[0].mxu0 %v369
        %v591 = vpop.f32.mrb[0].mxu0
        %v592 = vadd.f32 0.0, %v591
        %v593 = vpop.f32.mrb[0].mxu0
        %594 = vdwg.mxu0
        %595 = vmatprep.subr.mxu0 0.0
        %596 = vmatpush1.msra.mxu0 %v434
        %597 = vmatprep.subr.mxu0 0.0
        %598 = vmatpush1.msra.mxu0 %v435
        %599 = vmatprep.subr.mxu0 0.0
        %600 = vmatpush1.msra.mxu0 %v436
        %601 = vmatprep.subr.mxu0 0.0
        %602 = vmatpush1.msra.mxu0 %v437
        %603 = vmatprep.subr.mxu0 0.0
        %604 = vmatpush1.msra.mxu0 %v438
        %605 = vmatprep.subr.mxu0 0.0
        %606 = vmatpush1.msra.mxu0 %v439
        %607 = vmatprep.subr.mxu0 0.0
        %608 = vmatpush1.msra.mxu0 %v440
        %609 = vmatprep.subr.mxu0 0.0
        %610 = vmatpush1.msra.mxu0 %v441
        %611 = vmatprep.subr.mxu0 0.0
        %612 = vmatpush1.msra.mxu0 %v442
        %613 = vmatprep.subr.mxu0 0.0
        %614 = vmatpush1.msra.mxu0 %v443
        %615 = vmatprep.subr.mxu0 0.0
        %616 = vmatpush1.msra.mxu0 %v444
        %617 = vmatprep.subr.mxu0 0.0
        %618 = vmatpush1.msra.mxu0 %v445
        %619 = vmatprep.subr.mxu0 0.0
        %620 = vmatpush1.msra.mxu0 %v446
        %621 = vmatprep.subr.mxu0 0.0
        %622 = vmatpush1.msra.mxu0 %v447
        %623 = vmatprep.subr.mxu0 0.0
        %624 = vmatpush1.msra.mxu0 %v448
        %625 = vmatprep.subr.mxu0 0.0
        %626 = vmatpush1.msra.mxu0 %v449
        %627 = vmatprep.subr.mxu0 0.0
        %628 = vmatpush1.msra.mxu0 0.0
        %629 = vmatprep.subr.mxu0 0.0
        %630 = vmatpush1.msra.mxu0 0.0
        %631 = vmatprep.subr.mxu0 0.0
        %632 = vmatpush1.msra.mxu0 0.0
        %633 = vmatprep.subr.mxu0 0.0
        %634 = vmatpush1.msra.mxu0 0.0
        %635 = vmatprep.subr.mxu0 0.0
        %636 = vmatpush1.msra.mxu0 0.0
        %637 = vmatprep.subr.mxu0 0.0
        %638 = vmatpush1.msra.mxu0 0.0
        %639 = vmatprep.subr.mxu0 0.0
        %640 = vmatpush1.msra.mxu0 0.0
        %641 = vmatprep.subr.mxu0 0.0
        %642 = vmatpush1.msra.mxu0 0.0
        %643 = vmatprep.subr.mxu0 0.0
        %644 = vmatpush1.msra.mxu0 0.0
        %645 = vmatprep.subr.mxu0 0.0
        %646 = vmatpush1.msra.mxu0 0.0
        %647 = vmatprep.subr.mxu0 0.0
        %648 = vmatpush1.msra.mxu0 0.0
        %649 = vmatprep.subr.mxu0 0.0
        %650 = vmatpush1.msra.mxu0 0.0
        %651 = vmatprep.subr.mxu0 0.0
        %652 = vmatpush1.msra.mxu0 0.0
        %653 = vmatprep.subr.mxu0 0.0
        %654 = vmatpush1.msra.mxu0 0.0
        %655 = vmatprep.subr.mxu0 0.0
        %656 = vmatpush1.msra.mxu0 0.0
        %657 = vmatprep.subr.mxu0 0.0
        %658 = vmatpush1.msra.mxu0 0.0
        %659 = vmatprep.mubr.f32.mxu0 0.0
        %660 = vmatmul.mubr.f32.gmra.mrb[0].mxu0 %v386
        %v661 = vpop.f32.mrb[0].mxu0
        %v662 = vadd.f32 %v517, %v661
        %v663 = vpop.f32.mrb[0].mxu0
        %664 = vmatprep.mubr.f32.mxu0 0.0
        %665 = vmatmul.mubr.f32.gmra.mrb[0].mxu0 %v387
        %v666 = vpop.f32.mrb[0].mxu0
        %v667 = vadd.f32 %v522, %v666
        %v668 = vpop.f32.mrb[0].mxu0
        %669 = vmatprep.mubr.f32.mxu0 0.0
        %670 = vmatmul.mubr.f32.gmra.mrb[0].mxu0 %v388
        %v671 = vpop.f32.mrb[0].mxu0
        %v672 = vadd.f32 %v527, %v671
        %v673 = vpop.f32.mrb[0].mxu0
        %674 = vmatprep.mubr.f32.mxu0 0.0
        %675 = vmatmul.mubr.f32.gmra.mrb[0].mxu0 %v389
        %v676 = vpop.f32.mrb[0].mxu0
        %v677 = vadd.f32 %v532, %v676
        %v678 = vpop.f32.mrb[0].mxu0
        %679 = vmatprep.mubr.f32.mxu0 0.0
        %680 = vmatmul.mubr.f32.gmra.mrb[0].mxu0 %v390
        %v681 = vpop.f32.mrb[0].mxu0
        %v682 = vadd.f32 %v537, %v681
        %v683 = vpop.f32.mrb[0].mxu0
        %684 = vmatprep.mubr.f32.mxu0 0.0
        %685 = vmatmul.mubr.f32.gmra.mrb[0].mxu0 %v391
        %v686 = vpop.f32.mrb[0].mxu0
        %v687 = vadd.f32 %v542, %v686
        %v688 = vpop.f32.mrb[0].mxu0
        %689 = vmatprep.mubr.f32.mxu0 0.0
        %690 = vmatmul.mubr.f32.gmra.mrb[0].mxu0 %v392
        %v691 = vpop.f32.mrb[0].mxu0
        %v692 = vadd.f32 %v547, %v691
        %v693 = vpop.f32.mrb[0].mxu0
        %694 = vmatprep.mubr.f32.mxu0 0.0
        %695 = vmatmul.mubr.f32.gmra.mrb[0].mxu0 %v393
        %v696 = vpop.f32.mrb[0].mxu0
        %v697 = vadd.f32 %v552, %v696
        %v698 = vpop.f32.mrb[0].mxu0
        %699 = vmatprep.mubr.f32.mxu0 0.0
        %700 = vmatmul.mubr.f32.gmra.mrb[0].mxu0 %v394
        %v701 = vpop.f32.mrb[0].mxu0
        %v702 = vadd.f32 %v557, %v701
        %v703 = vpop.f32.mrb[0].mxu0
        %704 = vmatprep.mubr.f32.mxu0 0.0
        %705 = vmatmul.mubr.f32.gmra.mrb[0].mxu0 %v395
        %v706 = vpop.f32.mrb[0].mxu0
        %v707 = vadd.f32 %v562, %v706
        %v708 = vpop.f32.mrb[0].mxu0
        %709 = vmatprep.mubr.f32.mxu0 0.0
        %710 = vmatmul.mubr.f32.gmra.mrb[0].mxu0 %v396
        %v711 = vpop.f32.mrb[0].mxu0
        %v712 = vadd.f32 %v567, %v711
        %v713 = vpop.f32.mrb[0].mxu0
        %714 = vmatprep.mubr.f32.mxu0 0.0
        %715 = vmatmul.mubr.f32.gmra.mrb[0].mxu0 %v397
        %v716 = vpop.f32.mrb[0].mxu0
        %v717 = vadd.f32 %v572, %v716
        %v718 = vpop.f32.mrb[0].mxu0
        %719 = vmatprep.mubr.f32.mxu0 0.0
        %720 = vmatmul.mubr.f32.gmra.mrb[0].mxu0 %v398
        %v721 = vpop.f32.mrb[0].mxu0
        %v722 = vadd.f32 %v577, %v721
        %v723 = vpop.f32.mrb[0].mxu0
        %724 = vmatprep.mubr.f32.mxu0 0.0
        %725 = vmatmul.mubr.f32.gmra.mrb[0].mxu0 %v399
        %v726 = vpop.f32.mrb[0].mxu0
        %v727 = vadd.f32 %v582, %v726
        %v728 = vpop.f32.mrb[0].mxu0
        %729 = vmatprep.mubr.f32.mxu0 0.0
        %730 = vmatmul.mubr.f32.gmra.mrb[0].mxu0 %v400
        %v731 = vpop.f32.mrb[0].mxu0
        %v732 = vadd.f32 %v587, %v731
        %v733 = vpop.f32.mrb[0].mxu0
        %734 = vmatprep.mubr.f32.mxu0 0.0
        %735 = vmatmul.mubr.f32.gmra.mrb[0].mxu0 %v401
        %v736 = vpop.f32.mrb[0].mxu0
        %v737 = vadd.f32 %v592, %v736
        %v738 = vpop.f32.mrb[0].mxu0
        %739 = vdwg.mxu0
        %v740 = vlaneseq
        %v741 = vshrl.u32 %v740, 7
        %v742 = vsub.s32 2, %v741
        %v743 = vrot.slane %v277, %v742
        %v744 = vadd.f32 %v662, %v743
        %v745 = vadd.f32 %v667, %v743
        %v746 = vadd.f32 %v672, %v743
        %v747 = vadd.f32 %v677, %v743
        %v748 = vadd.f32 %v682, %v743
        %v749 = vadd.f32 %v687, %v743
        %v750 = vadd.f32 %v692, %v743
        %v751 = vadd.f32 %v697, %v743
        %v752 = vadd.f32 %v702, %v743
        %v753 = vadd.f32 %v707, %v743
        %v754 = vadd.f32 %v712, %v743
        %v755 = vadd.f32 %v717, %v743
        %v756 = vadd.f32 %v722, %v743
        %v757 = vadd.f32 %v727, %v743
        %v758 = vadd.f32 %v732, %v743
        %v759 = vadd.f32 %v737, %v743
        %v760 = vmax.f32 %v744, 0.0
        %v761 = vmax.f32 %v745, 0.0
        %v762 = vmax.f32 %v746, 0.0
        %v763 = vmax.f32 %v747, 0.0
        %v764 = vmax.f32 %v748, 0.0
        %v765 = vmax.f32 %v749, 0.0
        %v766 = vmax.f32 %v750, 0.0
        %v767 = vmax.f32 %v751, 0.0
        %v768 = vmax.f32 %v752, 0.0
        %v769 = vmax.f32 %v753, 0.0
        %v770 = vmax.f32 %v754, 0.0
        %v771 = vmax.f32 %v755, 0.0
        %v772 = vmax.f32 %v756, 0.0
        %v773 = vmax.f32 %v757, 0.0
        %v774 = vmax.f32 %v758, 0.0
        %v775 = vmax.f32 %v759, 0.0
        %776 = vst [vmem:[#allocation2 + $0x2] sm:$0xff] %v760
        %777 = vst [vmem:[#allocation2 + $0xa] sm:$0xff] %v761
        %778 = vst [vmem:[#allocation2 + $0x12] sm:$0xff] %v762
        %779 = vst [vmem:[#allocation2 + $0x1a] sm:$0xff] %v763
        %780 = vst [vmem:[#allocation2 + $0x22] sm:$0xff] %v764
        %781 = vst [vmem:[#allocation2 + $0x2a] sm:$0xff] %v765
        %782 = vst [vmem:[#allocation2 + $0x32] sm:$0xff] %v766
        %783 = vst [vmem:[#allocation2 + $0x3a] sm:$0xff] %v767
        %784 = vst [vmem:[#allocation2 + $0x4a] sm:$0xff] %v768
        %785 = vst [vmem:[#allocation2 + $0x52] sm:$0xff] %v769
        %786 = vst [vmem:[#allocation2 + $0x5a] sm:$0xff] %v770
        %787 = vst [vmem:[#allocation2 + $0x62] sm:$0xff] %v771
        %788 = vst [vmem:[#allocation2 + $0x6a] sm:$0xff] %v772
        %789 = vst [vmem:[#allocation2 + $0x72] sm:$0xff] %v773
        %790 = vst [vmem:[#allocation2 + $0x7a] sm:$0xff] %v774
        %791 = vst [vmem:[#allocation2 + $0x82] sm:$0xff] %v775
        %v792 = vld [vmem:[#allocation2] sm:$0xff]
        %v793 = vld [vmem:[#allocation2 + $0x8] sm:$0xff]
        %v794 = vld [vmem:[#allocation2 + $0x10] sm:$0xff]
        %v795 = vld [vmem:[#allocation2 + $0x18] sm:$0xff]
        %v796 = vld [vmem:[#allocation2 + $0x20] sm:$0xff]
        %v797 = vld [vmem:[#allocation2 + $0x28] sm:$0xff]
        %v798 = vld [vmem:[#allocation2 + $0x30] sm:$0xff]
        %v799 = vld [vmem:[#allocation2 + $0x38] sm:$0xff]
        %v800 = vld [vmem:[#allocation2 + $0x48] sm:$0xff]
        %v801 = vld [vmem:[#allocation2 + $0x50] sm:$0xff]
        %v802 = vld [vmem:[#allocation2 + $0x58] sm:$0xff]
        %v803 = vld [vmem:[#allocation2 + $0x60] sm:$0xff]
        %v804 = vld [vmem:[#allocation2 + $0x68] sm:$0xff]
        %v805 = vld [vmem:[#allocation2 + $0x70] sm:$0xff]
        %v806 = vld [vmem:[#allocation2 + $0x78] sm:$0xff]
        %v807 = vld [vmem:[#allocation2 + $0x80] sm:$0xff]
        %v808 = vld [vmem:[#allocation2 + $0x2] sm:$0xff]
        %v809 = vld [vmem:[#allocation2 + $0xa] sm:$0xff]
        %v810 = vld [vmem:[#allocation2 + $0x12] sm:$0xff]
        %v811 = vld [vmem:[#allocation2 + $0x1a] sm:$0xff]
        %v812 = vld [vmem:[#allocation2 + $0x22] sm:$0xff]
        %v813 = vld [vmem:[#allocation2 + $0x2a] sm:$0xff]
        %v814 = vld [vmem:[#allocation2 + $0x32] sm:$0xff]
        %v815 = vld [vmem:[#allocation2 + $0x3a] sm:$0xff]
        %v816 = vld [vmem:[#allocation2 + $0x4a] sm:$0xff]
        %v817 = vld [vmem:[#allocation2 + $0x52] sm:$0xff]
        %v818 = vld [vmem:[#allocation2 + $0x5a] sm:$0xff]
        %v819 = vld [vmem:[#allocation2 + $0x62] sm:$0xff]
        %v820 = vld [vmem:[#allocation2 + $0x6a] sm:$0xff]
        %v821 = vld [vmem:[#allocation2 + $0x72] sm:$0xff]
        %v822 = vld [vmem:[#allocation2 + $0x7a] sm:$0xff]
        %v823 = vld [vmem:[#allocation2 + $0x82] sm:$0xff]
        %v824 = vld [vmem:[#allocation2 + $0x4] sm:$0xff]
        %v825 = vld [vmem:[#allocation2 + $0xc] sm:$0xff]
        %v826 = vld [vmem:[#allocation2 + $0x14] sm:$0xff]
        %v827 = vld [vmem:[#allocation2 + $0x1c] sm:$0xff]
        %v828 = vld [vmem:[#allocation2 + $0x24] sm:$0xff]
        %v829 = vld [vmem:[#allocation2 + $0x2c] sm:$0xff]
        %v830 = vld [vmem:[#allocation2 + $0x34] sm:$0xff]
        %v831 = vld [vmem:[#allocation2 + $0x3c] sm:$0xff]
        %v832 = vld [vmem:[#allocation2 + $0x4c] sm:$0xff]
        %v833 = vld [vmem:[#allocation2 + $0x54] sm:$0xff]
        %v834 = vld [vmem:[#allocation2 + $0x5c] sm:$0xff]
        %v835 = vld [vmem:[#allocation2 + $0x64] sm:$0xff]
        %v836 = vld [vmem:[#allocation2 + $0x6c] sm:$0xff]
        %v837 = vld [vmem:[#allocation2 + $0x74] sm:$0xff]
        %v838 = vld [vmem:[#allocation2 + $0x7c] sm:$0xff]
        %v839 = vld [vmem:[#allocation2 + $0x84] sm:$0xff]
        %v840 = vld [vmem:[#allocation9] sm:$0xff]
        %v841 = vld [vmem:[#allocation9 + $0x8] sm:$0xff]
        %v842 = vld [vmem:[#allocation9 + $0x10] sm:$0xff]
        %v843 = vld [vmem:[#allocation9 + $0x18] sm:$0xff]
        %v844 = vld [vmem:[#allocation9 + $0x20] sm:$0xff]
        %v845 = vld [vmem:[#allocation9 + $0x28] sm:$0xff]
        %v846 = vld [vmem:[#allocation9 + $0x30] sm:$0xff]
        %v847 = vld [vmem:[#allocation9 + $0x38] sm:$0xff]
        %v848 = vld [vmem:[#allocation9 + $0x40] sm:$0xff]
        %v849 = vld [vmem:[#allocation9 + $0x48] sm:$0xff]
        %v850 = vld [vmem:[#allocation9 + $0x50] sm:$0xff]
        %v851 = vld [vmem:[#allocation9 + $0x58] sm:$0xff]
        %v852 = vld [vmem:[#allocation9 + $0x60] sm:$0xff]
        %v853 = vld [vmem:[#allocation9 + $0x68] sm:$0xff]
        %v854 = vld [vmem:[#allocation9 + $0x70] sm:$0xff]
        %v855 = vld [vmem:[#allocation9 + $0x78] sm:$0xff]
        %v856 = vld [vmem:[#allocation9 + $0x80] sm:$0xff]
        %v857 = vld [vmem:[#allocation9 + $0x88] sm:$0xff]
        %v858 = vld [vmem:[#allocation9 + $0x90] sm:$0xff]
        %v859 = vld [vmem:[#allocation9 + $0x98] sm:$0xff]
        %v860 = vld [vmem:[#allocation9 + $0xa0] sm:$0xff]
        %v861 = vld [vmem:[#allocation9 + $0xa8] sm:$0xff]
        %v862 = vld [vmem:[#allocation9 + $0xb0] sm:$0xff]
        %v863 = vld [vmem:[#allocation9 + $0xb8] sm:$0xff]
        %v864 = vld [vmem:[#allocation9 + $0xc0] sm:$0xff]
        %v865 = vld [vmem:[#allocation9 + $0xc8] sm:$0xff]
        %v866 = vld [vmem:[#allocation9 + $0xd0] sm:$0xff]
        %v867 = vld [vmem:[#allocation9 + $0xd8] sm:$0xff]
        %v868 = vld [vmem:[#allocation9 + $0xe0] sm:$0xff]
        %v869 = vld [vmem:[#allocation9 + $0xe8] sm:$0xff]
        %v870 = vld [vmem:[#allocation9 + $0xf0] sm:$0xff]
        %v871 = vld [vmem:[#allocation9 + $0xf8] sm:$0xff]
        %v872 = vld [vmem:[#allocation9 + $0x100] sm:$0xff]
        %v873 = vld [vmem:[#allocation9 + $0x108] sm:$0xff]
        %v874 = vld [vmem:[#allocation9 + $0x110] sm:$0xff]
        %v875 = vld [vmem:[#allocation9 + $0x118] sm:$0xff]
        %v876 = vld [vmem:[#allocation9 + $0x120] sm:$0xff]
        %v877 = vld [vmem:[#allocation9 + $0x128] sm:$0xff]
        %v878 = vld [vmem:[#allocation9 + $0x130] sm:$0xff]
        %v879 = vld [vmem:[#allocation9 + $0x138] sm:$0xff]
        %v880 = vld [vmem:[#allocation9 + $0x140] sm:$0xff]
        %v881 = vld [vmem:[#allocation9 + $0x148] sm:$0xff]
        %v882 = vld [vmem:[#allocation9 + $0x150] sm:$0xff]
        %v883 = vld [vmem:[#allocation9 + $0x158] sm:$0xff]
        %v884 = vld [vmem:[#allocation9 + $0x160] sm:$0xff]
        %v885 = vld [vmem:[#allocation9 + $0x168] sm:$0xff]
        %v886 = vld [vmem:[#allocation9 + $0x170] sm:$0xff]
        %v887 = vld [vmem:[#allocation9 + $0x178] sm:$0xff]
        %888 = vmatprep.subr.mxu0 0.0
        %889 = vmatpush1.msra.mxu0 %v840
        %890 = vmatprep.subr.mxu0 0.0
        %891 = vmatpush1.msra.mxu0 %v841
        %892 = vmatprep.subr.mxu0 0.0
        %893 = vmatpush1.msra.mxu0 %v842
        %894 = vmatprep.subr.mxu0 0.0
        %895 = vmatpush1.msra.mxu0 %v843
        %896 = vmatprep.subr.mxu0 0.0
        %897 = vmatpush1.msra.mxu0 %v844
        %898 = vmatprep.subr.mxu0 0.0
        %899 = vmatpush1.msra.mxu0 %v845
        %900 = vmatprep.subr.mxu0 0.0
        %901 = vmatpush1.msra.mxu0 %v846
        %902 = vmatprep.subr.mxu0 0.0
        %903 = vmatpush1.msra.mxu0 %v847
        %904 = vmatprep.subr.mxu0 0.0
        %905 = vmatpush1.msra.mxu0 %v848
        %906 = vmatprep.subr.mxu0 0.0
        %907 = vmatpush1.msra.mxu0 %v849
        %908 = vmatprep.subr.mxu0 0.0
        %909 = vmatpush1.msra.mxu0 %v850
        %910 = vmatprep.subr.mxu0 0.0
        %911 = vmatpush1.msra.mxu0 %v851
        %912 = vmatprep.subr.mxu0 0.0
        %913 = vmatpush1.msra.mxu0 %v852
        %914 = vmatprep.subr.mxu0 0.0
        %915 = vmatpush1.msra.mxu0 %v853
        %916 = vmatprep.subr.mxu0 0.0
        %917 = vmatpush1.msra.mxu0 %v854
        %918 = vmatprep.subr.mxu0 0.0
        %919 = vmatpush1.msra.mxu0 %v855
        %920 = vmatprep.subr.mxu0 0.0
        %921 = vmatpush1.msra.mxu0 %v856
        %922 = vmatprep.subr.mxu0 0.0
        %923 = vmatpush1.msra.mxu0 %v857
        %924 = vmatprep.subr.mxu0 0.0
        %925 = vmatpush1.msra.mxu0 %v858
        %926 = vmatprep.subr.mxu0 0.0
        %927 = vmatpush1.msra.mxu0 %v859
        %928 = vmatprep.subr.mxu0 0.0
        %929 = vmatpush1.msra.mxu0 %v860
        %930 = vmatprep.subr.mxu0 0.0
        %931 = vmatpush1.msra.mxu0 %v861
        %932 = vmatprep.subr.mxu0 0.0
        %933 = vmatpush1.msra.mxu0 %v862
        %934 = vmatprep.subr.mxu0 0.0
        %935 = vmatpush1.msra.mxu0 %v863
        %936 = vmatprep.subr.mxu0 0.0
        %937 = vmatpush1.msra.mxu0 %v864
        %938 = vmatprep.subr.mxu0 0.0
        %939 = vmatpush1.msra.mxu0 %v865
        %940 = vmatprep.subr.mxu0 0.0
        %941 = vmatpush1.msra.mxu0 %v866
        %942 = vmatprep.subr.mxu0 0.0
        %943 = vmatpush1.msra.mxu0 %v867
        %944 = vmatprep.subr.mxu0 0.0
        %945 = vmatpush1.msra.mxu0 %v868
        %946 = vmatprep.subr.mxu0 0.0
        %947 = vmatpush1.msra.mxu0 %v869
        %948 = vmatprep.subr.mxu0 0.0
        %949 = vmatpush1.msra.mxu0 %v870
        %950 = vmatprep.subr.mxu0 0.0
        %951 = vmatpush1.msra.mxu0 %v871
        %952 = vmatprep.mubr.f32.mxu0 %v808
        %953 = vmatmul.mubr.f32.gmra.mrb[0].mxu0 %v792
        %v954 = vpop.f32.mrb[0].mxu0
        %v955 = vadd.f32 0.0, %v954
        %v956 = vpop.f32.mrb[0].mxu0
        %957 = vmatprep.mubr.f32.mxu0 %v809
        %958 = vmatmul.mubr.f32.gmra.mrb[0].mxu0 %v793
        %v959 = vpop.f32.mrb[0].mxu0
        %v960 = vadd.f32 0.0, %v959
        %v961 = vpop.f32.mrb[0].mxu0
        %962 = vmatprep.mubr.f32.mxu0 %v810
        %963 = vmatmul.mubr.f32.gmra.mrb[0].mxu0 %v794
        %v964 = vpop.f32.mrb[0].mxu0
        %v965 = vadd.f32 0.0, %v964
        %v966 = vpop.f32.mrb[0].mxu0
        %967 = vmatprep.mubr.f32.mxu0 %v811
        %968 = vmatmul.mubr.f32.gmra.mrb[0].mxu0 %v795
        %v969 = vpop.f32.mrb[0].mxu0
        %v970 = vadd.f32 0.0, %v969
        %v971 = vpop.f32.mrb[0].mxu0
        %972 = vmatprep.mubr.f32.mxu0 %v812
        %973 = vmatmul.mubr.f32.gmra.mrb[0].mxu0 %v796
        %v974 = vpop.f32.mrb[0].mxu0
        %v975 = vadd.f32 0.0, %v974
        %v976 = vpop.f32.mrb[0].mxu0
        %977 = vmatprep.mubr.f32.mxu0 %v813
        %978 = vmatmul.mubr.f32.gmra.mrb[0].mxu0 %v797
        %v979 = vpop.f32.mrb[0].mxu0
        %v980 = vadd.f32 0.0, %v979
        %v981 = vpop.f32.mrb[0].mxu0
        %982 = vmatprep.mubr.f32.mxu0 %v814
        %983 = vmatmul.mubr.f32.gmra.mrb[0].mxu0 %v798
        %v984 = vpop.f32.mrb[0].mxu0
        %v985 = vadd.f32 0.0, %v984
        %v986 = vpop.f32.mrb[0].mxu0
        %987 = vmatprep.mubr.f32.mxu0 %v815
        %988 = vmatmul.mubr.f32.gmra.mrb[0].mxu0 %v799
        %v989 = vpop.f32.mrb[0].mxu0
        %v990 = vadd.f32 0.0, %v989
        %v991 = vpop.f32.mrb[0].mxu0
        %992 = vmatprep.mubr.f32.mxu0 %v816
        %993 = vmatmul.mubr.f32.gmra.mrb[0].mxu0 %v800
        %v994 = vpop.f32.mrb[0].mxu0
        %v995 = vadd.f32 0.0, %v994
        %v996 = vpop.f32.mrb[0].mxu0
        %997 = vmatprep.mubr.f32.mxu0 %v817
        %998 = vmatmul.mubr.f32.gmra.mrb[0].mxu0 %v801
        %v999 = vpop.f32.mrb[0].mxu0
        %v1000 = vadd.f32 0.0, %v999
        %v1001 = vpop.f32.mrb[0].mxu0
        %1002 = vmatprep.mubr.f32.mxu0 %v818
        %1003 = vmatmul.mubr.f32.gmra.mrb[0].mxu0 %v802
        %v1004 = vpop.f32.mrb[0].mxu0
        %v1005 = vadd.f32 0.0, %v1004
        %v1006 = vpop.f32.mrb[0].mxu0
        %1007 = vmatprep.mubr.f32.mxu0 %v819
        %1008 = vmatmul.mubr.f32.gmra.mrb[0].mxu0 %v803
        %v1009 = vpop.f32.mrb[0].mxu0
        %v1010 = vadd.f32 0.0, %v1009
        %v1011 = vpop.f32.mrb[0].mxu0
        %1012 = vmatprep.mubr.f32.mxu0 %v820
        %1013 = vmatmul.mubr.f32.gmra.mrb[0].mxu0 %v804
        %v1014 = vpop.f32.mrb[0].mxu0
        %v1015 = vadd.f32 0.0, %v1014
        %v1016 = vpop.f32.mrb[0].mxu0
        %1017 = vmatprep.mubr.f32.mxu0 %v821
        %1018 = vmatmul.mubr.f32.gmra.mrb[0].mxu0 %v805
        %v1019 = vpop.f32.mrb[0].mxu0
        %v1020 = vadd.f32 0.0, %v1019
        %v1021 = vpop.f32.mrb[0].mxu0
        %1022 = vmatprep.mubr.f32.mxu0 %v822
        %1023 = vmatmul.mubr.f32.gmra.mrb[0].mxu0 %v806
        %v1024 = vpop.f32.mrb[0].mxu0
        %v1025 = vadd.f32 0.0, %v1024
        %v1026 = vpop.f32.mrb[0].mxu0
        %1027 = vmatprep.mubr.f32.mxu0 %v823
        %1028 = vmatmul.mubr.f32.gmra.mrb[0].mxu0 %v807
        %v1029 = vpop.f32.mrb[0].mxu0
        %v1030 = vadd.f32 0.0, %v1029
        %v1031 = vpop.f32.mrb[0].mxu0
        %1032 = vdwg.mxu0
        %1033 = vmatprep.subr.mxu0 0.0
        %1034 = vmatpush1.msra.mxu0 %v872
        %1035 = vmatprep.subr.mxu0 0.0
        %1036 = vmatpush1.msra.mxu0 %v873
        %1037 = vmatprep.subr.mxu0 0.0
        %1038 = vmatpush1.msra.mxu0 %v874
        %1039 = vmatprep.subr.mxu0 0.0
        %1040 = vmatpush1.msra.mxu0 %v875
        %1041 = vmatprep.subr.mxu0 0.0
        %1042 = vmatpush1.msra.mxu0 %v876
        %1043 = vmatprep.subr.mxu0 0.0
        %1044 = vmatpush1.msra.mxu0 %v877
        %1045 = vmatprep.subr.mxu0 0.0
        %1046 = vmatpush1.msra.mxu0 %v878
        %1047 = vmatprep.subr.mxu0 0.0
        %1048 = vmatpush1.msra.mxu0 %v879
        %1049 = vmatprep.subr.mxu0 0.0
        %1050 = vmatpush1.msra.mxu0 %v880
        %1051 = vmatprep.subr.mxu0 0.0
        %1052 = vmatpush1.msra.mxu0 %v881
        %1053 = vmatprep.subr.mxu0 0.0
        %1054 = vmatpush1.msra.mxu0 %v882
        %1055 = vmatprep.subr.mxu0 0.0
        %1056 = vmatpush1.msra.mxu0 %v883
        %1057 = vmatprep.subr.mxu0 0.0
        %1058 = vmatpush1.msra.mxu0 %v884
        %1059 = vmatprep.subr.mxu0 0.0
        %1060 = vmatpush1.msra.mxu0 %v885
        %1061 = vmatprep.subr.mxu0 0.0
        %1062 = vmatpush1.msra.mxu0 %v886
        %1063 = vmatprep.subr.mxu0 0.0
        %1064 = vmatpush1.msra.mxu0 %v887
        %1065 = vmatprep.subr.mxu0 0.0
        %1066 = vmatpush1.msra.mxu0 0.0
        %1067 = vmatprep.subr.mxu0 0.0
        %1068 = vmatpush1.msra.mxu0 0.0
        %1069 = vmatprep.subr.mxu0 0.0
        %1070 = vmatpush1.msra.mxu0 0.0
        %1071 = vmatprep.subr.mxu0 0.0
        %1072 = vmatpush1.msra.mxu0 0.0
        %1073 = vmatprep.subr.mxu0 0.0
        %1074 = vmatpush1.msra.mxu0 0.0
        %1075 = vmatprep.subr.mxu0 0.0
        %1076 = vmatpush1.msra.mxu0 0.0
        %1077 = vmatprep.subr.mxu0 0.0
        %1078 = vmatpush1.msra.mxu0 0.0
        %1079 = vmatprep.subr.mxu0 0.0
        %1080 = vmatpush1.msra.mxu0 0.0
        %1081 = vmatprep.subr.mxu0 0.0
        %1082 = vmatpush1.msra.mxu0 0.0
        %1083 = vmatprep.subr.mxu0 0.0
        %1084 = vmatpush1.msra.mxu0 0.0
        %1085 = vmatprep.subr.mxu0 0.0
        %1086 = vmatpush1.msra.mxu0 0.0
        %1087 = vmatprep.subr.mxu0 0.0
        %1088 = vmatpush1.msra.mxu0 0.0
        %1089 = vmatprep.subr.mxu0 0.0
        %1090 = vmatpush1.msra.mxu0 0.0
        %1091 = vmatprep.subr.mxu0 0.0
        %1092 = vmatpush1.msra.mxu0 0.0
        %1093 = vmatprep.subr.mxu0 0.0
        %1094 = vmatpush1.msra.mxu0 0.0
        %1095 = vmatprep.subr.mxu0 0.0
        %1096 = vmatpush1.msra.mxu0 0.0
        %1097 = vmatprep.mubr.f32.mxu0 0.0
        %1098 = vmatmul.mubr.f32.gmra.mrb[0].mxu0 %v824
        %v1099 = vpop.f32.mrb[0].mxu0
        %v1100 = vadd.f32 %v955, %v1099
        %v1101 = vpop.f32.mrb[0].mxu0
        %1102 = vmatprep.mubr.f32.mxu0 0.0
        %1103 = vmatmul.mubr.f32.gmra.mrb[0].mxu0 %v825
        %v1104 = vpop.f32.mrb[0].mxu0
        %v1105 = vadd.f32 %v960, %v1104
        %v1106 = vpop.f32.mrb[0].mxu0
        %1107 = vmatprep.mubr.f32.mxu0 0.0
        %1108 = vmatmul.mubr.f32.gmra.mrb[0].mxu0 %v826
        %v1109 = vpop.f32.mrb[0].mxu0
        %v1110 = vadd.f32 %v965, %v1109
        %v1111 = vpop.f32.mrb[0].mxu0
        %1112 = vmatprep.mubr.f32.mxu0 0.0
        %1113 = vmatmul.mubr.f32.gmra.mrb[0].mxu0 %v827
        %v1114 = vpop.f32.mrb[0].mxu0
        %v1115 = vadd.f32 %v970, %v1114
        %v1116 = vpop.f32.mrb[0].mxu0
        %1117 = vmatprep.mubr.f32.mxu0 0.0
        %1118 = vmatmul.mubr.f32.gmra.mrb[0].mxu0 %v828
        %v1119 = vpop.f32.mrb[0].mxu0
        %v1120 = vadd.f32 %v975, %v1119
        %v1121 = vpop.f32.mrb[0].mxu0
        %1122 = vmatprep.mubr.f32.mxu0 0.0
        %1123 = vmatmul.mubr.f32.gmra.mrb[0].mxu0 %v829
        %v1124 = vpop.f32.mrb[0].mxu0
        %v1125 = vadd.f32 %v980, %v1124
        %v1126 = vpop.f32.mrb[0].mxu0
        %1127 = vmatprep.mubr.f32.mxu0 0.0
        %1128 = vmatmul.mubr.f32.gmra.mrb[0].mxu0 %v830
        %v1129 = vpop.f32.mrb[0].mxu0
        %v1130 = vadd.f32 %v985, %v1129
        %v1131 = vpop.f32.mrb[0].mxu0
        %1132 = vmatprep.mubr.f32.mxu0 0.0
        %1133 = vmatmul.mubr.f32.gmra.mrb[0].mxu0 %v831
        %v1134 = vpop.f32.mrb[0].mxu0
        %v1135 = vadd.f32 %v990, %v1134
        %v1136 = vpop.f32.mrb[0].mxu0
        %1137 = vmatprep.mubr.f32.mxu0 0.0
        %1138 = vmatmul.mubr.f32.gmra.mrb[0].mxu0 %v832
        %v1139 = vpop.f32.mrb[0].mxu0
        %v1140 = vadd.f32 %v995, %v1139
        %v1141 = vpop.f32.mrb[0].mxu0
        %1142 = vmatprep.mubr.f32.mxu0 0.0
        %1143 = vmatmul.mubr.f32.gmra.mrb[0].mxu0 %v833
        %v1144 = vpop.f32.mrb[0].mxu0
        %v1145 = vadd.f32 %v1000, %v1144
        %v1146 = vpop.f32.mrb[0].mxu0
        %1147 = vmatprep.mubr.f32.mxu0 0.0
        %1148 = vmatmul.mubr.f32.gmra.mrb[0].mxu0 %v834
        %v1149 = vpop.f32.mrb[0].mxu0
        %v1150 = vadd.f32 %v1005, %v1149
        %v1151 = vpop.f32.mrb[0].mxu0
        %1152 = vmatprep.mubr.f32.mxu0 0.0
        %1153 = vmatmul.mubr.f32.gmra.mrb[0].mxu0 %v835
        %v1154 = vpop.f32.mrb[0].mxu0
        %v1155 = vadd.f32 %v1010, %v1154
        %v1156 = vpop.f32.mrb[0].mxu0
        %1157 = vmatprep.mubr.f32.mxu0 0.0
        %1158 = vmatmul.mubr.f32.gmra.mrb[0].mxu0 %v836
        %v1159 = vpop.f32.mrb[0].mxu0
        %v1160 = vadd.f32 %v1015, %v1159
        %v1161 = vpop.f32.mrb[0].mxu0
        %1162 = vmatprep.mubr.f32.mxu0 0.0
        %1163 = vmatmul.mubr.f32.gmra.mrb[0].mxu0 %v837
        %v1164 = vpop.f32.mrb[0].mxu0
        %v1165 = vadd.f32 %v1020, %v1164
        %v1166 = vpop.f32.mrb[0].mxu0
        %1167 = vmatprep.mubr.f32.mxu0 0.0
        %1168 = vmatmul.mubr.f32.gmra.mrb[0].mxu0 %v838
        %v1169 = vpop.f32.mrb[0].mxu0
        %v1170 = vadd.f32 %v1025, %v1169
        %v1171 = vpop.f32.mrb[0].mxu0
        %1172 = vmatprep.mubr.f32.mxu0 0.0
        %1173 = vmatmul.mubr.f32.gmra.mrb[0].mxu0 %v839
        %v1174 = vpop.f32.mrb[0].mxu0
        %v1175 = vadd.f32 %v1030, %v1174
        %v1176 = vpop.f32.mrb[0].mxu0
        %1177 = vdwg.mxu0
        %v1178 = vlaneseq
        %v1179 = vshrl.u32 %v1178, 7
        %v1180 = vsub.s32 3, %v1179
        %v1181 = vrot.slane %v277, %v1180
        %v1182 = vadd.f32 %v1100, %v1181
        %v1183 = vadd.f32 %v1105, %v1181
        %v1184 = vadd.f32 %v1110, %v1181
        %v1185 = vadd.f32 %v1115, %v1181
        %v1186 = vadd.f32 %v1120, %v1181
        %v1187 = vadd.f32 %v1125, %v1181
        %v1188 = vadd.f32 %v1130, %v1181
        %v1189 = vadd.f32 %v1135, %v1181
        %v1190 = vadd.f32 %v1140, %v1181
        %v1191 = vadd.f32 %v1145, %v1181
        %v1192 = vadd.f32 %v1150, %v1181
        %v1193 = vadd.f32 %v1155, %v1181
        %v1194 = vadd.f32 %v1160, %v1181
        %v1195 = vadd.f32 %v1165, %v1181
        %v1196 = vadd.f32 %v1170, %v1181
        %v1197 = vadd.f32 %v1175, %v1181
        %v1198 = vadd.f32 %v1182, %v261
        %v1199 = vadd.f32 %v1183, %v262
        %v1200 = vadd.f32 %v1184, %v263
        %v1201 = vadd.f32 %v1185, %v264
        %v1202 = vadd.f32 %v1186, %v265
        %v1203 = vadd.f32 %v1187, %v266
        %v1204 = vadd.f32 %v1188, %v267
        %v1205 = vadd.f32 %v1189, %v268
        %v1206 = vadd.f32 %v1190, %v269
        %v1207 = vadd.f32 %v1191, %v270
        %v1208 = vadd.f32 %v1192, %v271
        %v1209 = vadd.f32 %v1193, %v272
        %v1210 = vadd.f32 %v1194, %v273
        %v1211 = vadd.f32 %v1195, %v274
        %v1212 = vadd.f32 %v1196, %v275
        %v1213 = vadd.f32 %v1197, %v276
        %1214 = vst [vmem:[%s258] sm:$0xff] %v1198
        %1215 = vst [vmem:[%s258 + $0x8] sm:$0xff] %v1199
        %1216 = vst [vmem:[%s258 + $0x10] sm:$0xff] %v1200
        %1217 = vst [vmem:[%s258 + $0x18] sm:$0xff] %v1201
        %1218 = vst [vmem:[%s258 + $0x20] sm:$0xff] %v1202
        %1219 = vst [vmem:[%s258 + $0x28] sm:$0xff] %v1203
        %1220 = vst [vmem:[%s258 + $0x30] sm:$0xff] %v1204
        %1221 = vst [vmem:[%s258 + $0x38] sm:$0xff] %v1205
        %1222 = vst [vmem:[%s258 + $0x40] sm:$0xff] %v1206
        %1223 = vst [vmem:[%s258 + $0x48] sm:$0xff] %v1207
        %1224 = vst [vmem:[%s258 + $0x50] sm:$0xff] %v1208
        %1225 = vst [vmem:[%s258 + $0x58] sm:$0xff] %v1209
        %1226 = vst [vmem:[%s258 + $0x60] sm:$0xff] %v1210
        %1227 = vst [vmem:[%s258 + $0x68] sm:$0xff] %v1211
        %1228 = vst [vmem:[%s258 + $0x70] sm:$0xff] %v1212
        %1229 = vst [vmem:[%s258 + $0x78] sm:$0xff] %v1213
        %s1230 = sand.u32 %s120, 1
        %s1231 = scalar_lea.sflag [#allocation5], %s1230
        %s1232 = sand.u32 %s120, 1
        %s1233 = smul.addr %s1232, 128
        %s1234 = scalar_lea.vmem [#allocation11], %s1233
        // Predicated region
        $region53: #{tpu_custom_call.1} parent=35 // pred_check
          %p1235 = pneg %p130
        $region54: #{tpu_custom_call.1} parent=35 // pred_check_branch
          %1237 = sbr.rel (%p1235) target = $region56
        $region55: #{tpu_custom_call.1} parent=35 // pred_region
          %s1238 = smul.u32 2, %s23
          %s1240 = ssub.s32 2048, 2048
          %1241 = vsyncadd %s1231, %s1240
          %s1242 = smul.addr %s1238, 8
          %s1243 = smul.addr %s1242, 128
          %s1244 = scalar_lea.hbm %s4, %s1243
          %s1245 = sshll.u32 %s1234, 4
          %s1246 = int_to_ptr.vmem [resolvable:$true] %s1245
          %1251 = dma.vmem_to_hbm [thread:$0]  %s1246, 2048, %s1244, %s1231, 128, 128, 8
        $region56: #{tpu_custom_call.1} parent=35 // pred_fallthru
          _
      $region36: #{tpu_custom_call.1} parent=5 // pred_fallthru
        _
      %p1252 = scmp.le.s32.totalorder 2, %s18
      // Predicated region
      $region57: #{tpu_custom_call.1} parent=5 // pred_check
        %p1253 = pneg %p1252
      $region58: #{tpu_custom_call.1} parent=5 // pred_check_branch
        %1255 = sbr.rel (%p1253) target = $region60
      $region59: #{tpu_custom_call.1} parent=5 // pred_region
        %s1256 = ssub.s32 %s18, 2
        // Predicated region
        $region61: #{tpu_custom_call.1} parent=59 // pred_check
          %p1257 = pneg %p136
        $region62: #{tpu_custom_call.1} parent=59 // pred_check_branch
          %1259 = sbr.rel (%p1257) target = $region64
        $region63: #{tpu_custom_call.1} parent=59 // pred_region
          %s1260 = sand.u32 %s121, 1
          %s1261 = scalar_lea.sflag [#allocation5], %s1260
          %s1262 = sand.u32 %s121, 1
          %s1263 = smul.addr %s1262, 128
          %s1264 = scalar_lea.vmem [#allocation11], %s1263
          %1265 = dma.done %s1261, 2048
        $region64: #{tpu_custom_call.1} parent=59 // pred_fallthru
          _
      $region60: #{tpu_custom_call.1} parent=5 // pred_fallthru
        _
    $region6: #{tpu_custom_call.1} parent=1 // loop_footer
      %s22 = sadd.s32 1, %s18
    $region7: #{tpu_custom_call.1} parent=1 // loop_footer_branch
      %17 = sbr.rel target = $region3
    $region8: #{tpu_custom_call.1} parent=1 // loop_exit
      _
    %1266 = vsyncpa [#allocation4], 1
    %s1267 = scalar_lea.sflag [#allocation4], 1
    %1268 = vsyncpa %s1267, 1
    %1269 = vsyncpa [#allocation7], 1
    %1270 = vsyncpa [#allocation10], 1
    %1271 = vsyncpa [#allocation5], 1
    %s1272 = scalar_lea.sflag [#allocation5], 1
    %1273 = vsyncpa %s1272, 1

</llo_original>
